<compile_context>
chip_gen: v7x
topology: tpu7x:2x2x1
jax: 0.10.0
libtpu: 0.0.40
codegen_flags: <defaults>
</compile_context>

<pallas_src>
import functools

import jax
import jax.numpy as jnp
from jax.experimental import pallas as pl
from jax.experimental.pallas import tpu as pltpu

# ----------------------------- configuration -------------------------------
EMBED_DIM = 32        # embedding_dim
PROJ_DIM = 64         # CFG.projection_dim
C_IN = 64             # hardcoded C_in in the module
GRID_SIZE = 8         # KAN spline grid intervals
SPLINE_ORDER = 3      # cubic B-splines
NUM_BASES = GRID_SIZE + SPLINE_ORDER        # 11 B-spline basis functions
FUSED_K = (NUM_BASES + 1) * C_IN            # 768 = [SiLU | bases] feature width
LN_EPS = 1e-5
DEFAULT_TILE_N = 1024                       # rows per grid step (sweepable)


def _round_up(a, b):
    return ((a + b - 1) // b) * b


# ------------------------------- kernel ------------------------------------
def projection_head_kernel(x_ref, wp_ref, bp_ref, wi_ref, bi_ref,
                           wkan_ref, wo_ref, bo_ref,
                           gamma_ref, beta_ref, out_ref):
    f32 = jnp.float32
    x = x_ref[...].astype(f32)

    # ---- projection + GELU (exact, erf based, matching nn.GELU()) ----
    projected = jnp.dot(x, wp_ref[...], preferred_element_type=f32) + bp_ref[...]
    h = projected * 0.5 * (1.0 + jax.lax.erf(projected * 0.7071067811865476))

    # ---- fc_in ----
    z = jnp.dot(h, wi_ref[...], preferred_element_type=f32) + bi_ref[...]

    # ---- KAN layer (width=[C_IN, C_IN]) ----
    # Cubic B-spline bases on a uniform grid over [-1, 1] extended by
    # SPLINE_ORDER knots per side.  Work in knot-index coordinates
    # u = (z + 1) / hstep so knot t sits at u = t - K; then
    #   (z - knots[t]) / (knots[t+p] - knots[t])           = d[t] / p
    #   (knots[t+p+1] - z) / (knots[t+p+1] - knots[t+1])   = -d[t+p+1] / p
    # with d[t] = u - (t - K).  d[] is computed once and reused at all levels.
    G, K = GRID_SIZE, SPLINE_ORDER
    hstep = 2.0 / G
    u = (z + 1.0) * (1.0 / hstep)
    d = [u - float(t - K) for t in range(G + 2 * K + 1)]

    bases = [
        jnp.where((d[t] >= 0.0) & (d[t + 1] < 0.0), f32(1.0), f32(0.0))
        for t in range(G + 2 * K)
    ]
    for p in range(1, K + 1):
        inv_p = 1.0 / p
        bases = [
            (d[t] * bases[t] - d[t + p + 1] * bases[t + 1]) * inv_p
            for t in range(G + 2 * K - p)
        ]
    # bases: NUM_BASES arrays of shape (TILE_N, C_IN)

    # Fused base + spline branch: one (TILE_N, 768) @ (768, C_IN) matmul
    # against the host-prepacked weight [Wb ; Wsp_flat].
    feats = jnp.concatenate([z * jax.nn.sigmoid(z)] + bases, axis=-1)
    k_out = jnp.dot(feats, wkan_ref[...], preferred_element_type=f32)

    # ---- fc_out ----
    y = jnp.dot(k_out, wo_ref[...], preferred_element_type=f32) + bo_ref[...]

    # ---- dropout: identity in eval mode ----

    # ---- residual + LayerNorm over projection_dim ----
    y = y + projected
    mean = jnp.mean(y, axis=-1, keepdims=True)
    var = jnp.mean((y - mean) ** 2, axis=-1, keepdims=True)
    y = (y - mean) * jax.lax.rsqrt(var + LN_EPS)
    y = y * gamma_ref[...] + beta_ref[...]

    out_ref[...] = y.astype(out_ref.dtype)


# ------------------------------- wrapper ------------------------------------
def _resident_spec(shape):
    """Full-array block that stays in VMEM across all grid steps."""
    n = len(shape)
    return pl.BlockSpec(shape, lambda i: (0,) * n)


@functools.partial(jax.jit, static_argnames=("tile_n",))
def projection_head(x, params, tile_n=DEFAULT_TILE_N):
    n, e = x.shape
    assert e == EMBED_DIM

    # Tile the batch dimension; clamp the tile for small inputs and pad N so
    # the grid divides evenly (padded rows are sliced off afterwards).
    tile_n = min(tile_n, _round_up(n, 8))
    n_pad = _round_up(n, tile_n)
    if n_pad != n:
        x = jnp.pad(x, ((0, n_pad - n), (0, 0)))
    grid = (n_pad // tile_n,)

    weights = (
        params["wp"], params["bp"],
        params["wi"], params["bi"],
        params["w_kan"],
        params["wo"], params["bo"],
        params["gamma"], params["beta"],
    )
    in_specs = [pl.BlockSpec((tile_n, EMBED_DIM), lambda i: (i, 0))]
    in_specs += [_resident_spec(w.shape) for w in weights]

    out = pl.pallas_call(
        projection_head_kernel,
        out_shape=jax.ShapeDtypeStruct((n_pad, PROJ_DIM), jnp.float32),
        grid=grid,
        in_specs=in_specs,
        out_specs=pl.BlockSpec((tile_n, PROJ_DIM), lambda i: (i, 0)),
        compiler_params=pltpu.CompilerParams(
            dimension_semantics=("parallel",),
            vmem_limit_bytes=48 * 1024 * 1024,
        ),
    )(x, *weights)
    return out[:n]


def init_params(key):
    ks = jax.random.split(key, 8)

    def lin(k, fan_in, fan_out):
        # Kaiming-uniform-ish deterministic init; weight stored as (in, out).
        bound = 1.0 / (fan_in ** 0.5)
        kw, kb = jax.random.split(k)
        w = jax.random.uniform(kw, (fan_in, fan_out), jnp.float32, -bound, bound)
        b = jax.random.uniform(kb, (1, fan_out), jnp.float32, -bound, bound)
        return w, b

    wp, bp = lin(ks[0], EMBED_DIM, PROJ_DIM)          # projection
    wi, bi = lin(ks[1], PROJ_DIM, C_IN)               # fc_in
    wo, bo = lin(ks[2], C_IN, PROJ_DIM)               # fc_out

    # KAN parameters: base weight (C_IN, C_IN) and spline coefficients
    # (NUM_BASES, C_IN, C_IN), pre-flattened host-side into one fused
    # (FUSED_K, C_IN) matrix matching the in-kernel [SiLU | bases] concat.
    wb = jax.random.uniform(ks[3], (C_IN, C_IN), jnp.float32,
                            -1.0 / (C_IN ** 0.5), 1.0 / (C_IN ** 0.5))
    wsp = 0.1 * jax.random.normal(ks[4], (NUM_BASES, C_IN, C_IN), jnp.float32)
    w_kan = jnp.concatenate([wb, wsp.reshape(NUM_BASES * C_IN, C_IN)], axis=0)

    gamma = jnp.ones((1, PROJ_DIM), jnp.float32)      # LayerNorm weight
    beta = jnp.zeros((1, PROJ_DIM), jnp.float32)      # LayerNorm bias
    return dict(wp=wp, bp=bp, wi=wi, bi=bi, w_kan=w_kan,
                wo=wo, bo=bo, gamma=gamma, beta=beta)


if __name__ == "__main__":
    key = jax.random.PRNGKey(0)
    kx, kp = jax.random.split(key)
    x = jax.random.normal(kx, (16, EMBED_DIM), jnp.float32)  # (N, E)
    params = init_params(kp)

    out = projection_head(x, params)
    jax.block_until_ready(out)
    assert out.shape == (16, PROJ_DIM) and out.dtype == jnp.float32
    print("KERNEL_OK")
</pallas_src>

<mosaic_0001>
module attributes {stable_mosaic.version = 11 : i64} {
  func.func @projection_head_kernel(%arg0: i32, %arg1: memref<16x32xf32, #tpu.memory_space<vmem>>, %arg2: memref<32x64xf32, #tpu.memory_space<vmem>>, %arg3: memref<1x64xf32, #tpu.memory_space<vmem>>, %arg4: memref<64x64xf32, #tpu.memory_space<vmem>>, %arg5: memref<1x64xf32, #tpu.memory_space<vmem>>, %arg6: memref<768x64xf32, #tpu.memory_space<vmem>>, %arg7: memref<64x64xf32, #tpu.memory_space<vmem>>, %arg8: memref<1x64xf32, #tpu.memory_space<vmem>>, %arg9: memref<1x64xf32, #tpu.memory_space<vmem>>, %arg10: memref<1x64xf32, #tpu.memory_space<vmem>>, %arg11: memref<16x64xf32, #tpu.memory_space<vmem>>) attributes {dimension_semantics = [#tpu.dimension_semantics<parallel>], iteration_bounds = array<i64: 1>, scalar_prefetch = 0 : i64, scratch_operands = 0 : i64, tpu.core_type = #tpu.core_type<tc>, window_params = [{transform_indices = @transform_0, window_bounds = array<i64: 16, 32>}, {pipeline_mode = #tpu.pipeline_mode<synchronous>, transform_indices = @transform_1, window_bounds = array<i64: 32, 64>}, {pipeline_mode = #tpu.pipeline_mode<synchronous>, transform_indices = @transform_2, window_bounds = array<i64: 1, 64>}, {pipeline_mode = #tpu.pipeline_mode<synchronous>, transform_indices = @transform_3, window_bounds = array<i64: 64, 64>}, {pipeline_mode = #tpu.pipeline_mode<synchronous>, transform_indices = @transform_4, window_bounds = array<i64: 1, 64>}, {pipeline_mode = #tpu.pipeline_mode<synchronous>, transform_indices = @transform_5, window_bounds = array<i64: 768, 64>}, {pipeline_mode = #tpu.pipeline_mode<synchronous>, transform_indices = @transform_6, window_bounds = array<i64: 64, 64>}, {pipeline_mode = #tpu.pipeline_mode<synchronous>, transform_indices = @transform_7, window_bounds = array<i64: 1, 64>}, {pipeline_mode = #tpu.pipeline_mode<synchronous>, transform_indices = @transform_8, window_bounds = array<i64: 1, 64>}, {pipeline_mode = #tpu.pipeline_mode<synchronous>, transform_indices = @transform_9, window_bounds = array<i64: 1, 64>}, {transform_indices = @transform_10, window_bounds = array<i64: 16, 64>}]} {
    %c0 = arith.constant 0 : index
    %c0_0 = arith.constant 0 : index
    %0 = vector.load %arg1[%c0, %c0_0] : memref<16x32xf32, #tpu.memory_space<vmem>>, vector<16x32xf32>
    %c0_1 = arith.constant 0 : index
    %c0_2 = arith.constant 0 : index
    %1 = vector.load %arg2[%c0_1, %c0_2] : memref<32x64xf32, #tpu.memory_space<vmem>>, vector<32x64xf32>
    %cst = arith.constant dense<0.000000e+00> : vector<16x64xf32>
    %2 = tpu.matmul %0, %1, %cst {dimension_numbers = #tpu.dot_dimension_numbers<[1], [0], [0], [1], [0, 0, 1, 1], [], []>} : vector<16x32xf32>, vector<32x64xf32>, vector<16x64xf32> -> vector<16x64xf32>
    %c0_3 = arith.constant 0 : index
    %c0_4 = arith.constant 0 : index
    %3 = vector.load %arg3[%c0_3, %c0_4] : memref<1x64xf32, #tpu.memory_space<vmem>>, vector<1x64xf32>
    %4 = vector.broadcast %3 : vector<1x64xf32> to vector<16x64xf32>
    %5 = arith.addf %2, %4 : vector<16x64xf32>
    %cst_5 = arith.constant 5.000000e-01 : f32
    %6 = vector.broadcast %cst_5 : f32 to vector<16x64xf32>
    %7 = arith.mulf %5, %6 : vector<16x64xf32>
    %cst_6 = arith.constant 0.707106769 : f32
    %8 = vector.broadcast %cst_6 : f32 to vector<16x64xf32>
    %9 = arith.mulf %5, %8 : vector<16x64xf32>
    %10 = math.erf %9 : vector<16x64xf32>
    %cst_7 = arith.constant 1.000000e+00 : f32
    %11 = vector.broadcast %cst_7 : f32 to vector<16x64xf32>
    %12 = arith.addf %11, %10 : vector<16x64xf32>
    %13 = arith.mulf %7, %12 : vector<16x64xf32>
    %c0_8 = arith.constant 0 : index
    %c0_9 = arith.constant 0 : index
    %14 = vector.load %arg4[%c0_8, %c0_9] : memref<64x64xf32, #tpu.memory_space<vmem>>, vector<64x64xf32>
    %cst_10 = arith.constant dense<0.000000e+00> : vector<16x64xf32>
    %15 = tpu.matmul %13, %14, %cst_10 {dimension_numbers = #tpu.dot_dimension_numbers<[1], [0], [0], [1], [0, 0, 1, 1], [], []>} : vector<16x64xf32>, vector<64x64xf32>, vector<16x64xf32> -> vector<16x64xf32>
    %c0_11 = arith.constant 0 : index
    %c0_12 = arith.constant 0 : index
    %16 = vector.load %arg5[%c0_11, %c0_12] : memref<1x64xf32, #tpu.memory_space<vmem>>, vector<1x64xf32>
    %17 = vector.broadcast %16 : vector<1x64xf32> to vector<16x64xf32>
    %18 = arith.addf %15, %17 : vector<16x64xf32>
    %cst_13 = arith.constant 1.000000e+00 : f32
    %19 = vector.broadcast %cst_13 : f32 to vector<16x64xf32>
    %20 = arith.addf %18, %19 : vector<16x64xf32>
    %cst_14 = arith.constant 4.000000e+00 : f32
    %21 = vector.broadcast %cst_14 : f32 to vector<16x64xf32>
    %22 = arith.mulf %20, %21 : vector<16x64xf32>
    %cst_15 = arith.constant -3.000000e+00 : f32
    %23 = vector.broadcast %cst_15 : f32 to vector<16x64xf32>
    %24 = arith.subf %22, %23 : vector<16x64xf32>
    %cst_16 = arith.constant -2.000000e+00 : f32
    %25 = vector.broadcast %cst_16 : f32 to vector<16x64xf32>
    %26 = arith.subf %22, %25 : vector<16x64xf32>
    %cst_17 = arith.constant -1.000000e+00 : f32
    %27 = vector.broadcast %cst_17 : f32 to vector<16x64xf32>
    %28 = arith.subf %22, %27 : vector<16x64xf32>
    %cst_18 = arith.constant 0.000000e+00 : f32
    %29 = vector.broadcast %cst_18 : f32 to vector<16x64xf32>
    %30 = arith.subf %22, %29 : vector<16x64xf32>
    %cst_19 = arith.constant 1.000000e+00 : f32
    %31 = vector.broadcast %cst_19 : f32 to vector<16x64xf32>
    %32 = arith.subf %22, %31 : vector<16x64xf32>
    %cst_20 = arith.constant 2.000000e+00 : f32
    %33 = vector.broadcast %cst_20 : f32 to vector<16x64xf32>
    %34 = arith.subf %22, %33 : vector<16x64xf32>
    %cst_21 = arith.constant 3.000000e+00 : f32
    %35 = vector.broadcast %cst_21 : f32 to vector<16x64xf32>
    %36 = arith.subf %22, %35 : vector<16x64xf32>
    %cst_22 = arith.constant 4.000000e+00 : f32
    %37 = vector.broadcast %cst_22 : f32 to vector<16x64xf32>
    %38 = arith.subf %22, %37 : vector<16x64xf32>
    %cst_23 = arith.constant 5.000000e+00 : f32
    %39 = vector.broadcast %cst_23 : f32 to vector<16x64xf32>
    %40 = arith.subf %22, %39 : vector<16x64xf32>
    %cst_24 = arith.constant 6.000000e+00 : f32
    %41 = vector.broadcast %cst_24 : f32 to vector<16x64xf32>
    %42 = arith.subf %22, %41 : vector<16x64xf32>
    %cst_25 = arith.constant 7.000000e+00 : f32
    %43 = vector.broadcast %cst_25 : f32 to vector<16x64xf32>
    %44 = arith.subf %22, %43 : vector<16x64xf32>
    %cst_26 = arith.constant 8.000000e+00 : f32
    %45 = vector.broadcast %cst_26 : f32 to vector<16x64xf32>
    %46 = arith.subf %22, %45 : vector<16x64xf32>
    %cst_27 = arith.constant 9.000000e+00 : f32
    %47 = vector.broadcast %cst_27 : f32 to vector<16x64xf32>
    %48 = arith.subf %22, %47 : vector<16x64xf32>
    %cst_28 = arith.constant 1.000000e+01 : f32
    %49 = vector.broadcast %cst_28 : f32 to vector<16x64xf32>
    %50 = arith.subf %22, %49 : vector<16x64xf32>
    %cst_29 = arith.constant 1.100000e+01 : f32
    %51 = vector.broadcast %cst_29 : f32 to vector<16x64xf32>
    %52 = arith.subf %22, %51 : vector<16x64xf32>
    %cst_30 = arith.constant 0.000000e+00 : f32
    %53 = vector.broadcast %cst_30 : f32 to vector<16x64xf32>
    %54 = arith.cmpf oge, %24, %53 : vector<16x64xf32>
    %cst_31 = arith.constant 0.000000e+00 : f32
    %55 = vector.broadcast %cst_31 : f32 to vector<16x64xf32>
    %56 = arith.cmpf olt, %26, %55 : vector<16x64xf32>
    %57 = arith.andi %54, %56 : vector<16x64xi1>
    %cst_32 = arith.constant 1.000000e+00 : f32
    %cst_33 = arith.constant 0.000000e+00 : f32
    %58 = vector.broadcast %cst_32 : f32 to vector<16x64xf32>
    %59 = vector.broadcast %cst_33 : f32 to vector<16x64xf32>
    %60 = arith.select %57, %58, %59 : vector<16x64xi1>, vector<16x64xf32>
    %cst_34 = arith.constant 0.000000e+00 : f32
    %61 = vector.broadcast %cst_34 : f32 to vector<16x64xf32>
    %62 = arith.cmpf oge, %26, %61 : vector<16x64xf32>
    %cst_35 = arith.constant 0.000000e+00 : f32
    %63 = vector.broadcast %cst_35 : f32 to vector<16x64xf32>
    %64 = arith.cmpf olt, %28, %63 : vector<16x64xf32>
    %65 = arith.andi %62, %64 : vector<16x64xi1>
    %cst_36 = arith.constant 1.000000e+00 : f32
    %cst_37 = arith.constant 0.000000e+00 : f32
    %66 = vector.broadcast %cst_36 : f32 to vector<16x64xf32>
    %67 = vector.broadcast %cst_37 : f32 to vector<16x64xf32>
    %68 = arith.select %65, %66, %67 : vector<16x64xi1>, vector<16x64xf32>
    %cst_38 = arith.constant 0.000000e+00 : f32
    %69 = vector.broadcast %cst_38 : f32 to vector<16x64xf32>
    %70 = arith.cmpf oge, %28, %69 : vector<16x64xf32>
    %cst_39 = arith.constant 0.000000e+00 : f32
    %71 = vector.broadcast %cst_39 : f32 to vector<16x64xf32>
    %72 = arith.cmpf olt, %30, %71 : vector<16x64xf32>
    %73 = arith.andi %70, %72 : vector<16x64xi1>
    %cst_40 = arith.constant 1.000000e+00 : f32
    %cst_41 = arith.constant 0.000000e+00 : f32
    %74 = vector.broadcast %cst_40 : f32 to vector<16x64xf32>
    %75 = vector.broadcast %cst_41 : f32 to vector<16x64xf32>
    %76 = arith.select %73, %74, %75 : vector<16x64xi1>, vector<16x64xf32>
    %cst_42 = arith.constant 0.000000e+00 : f32
    %77 = vector.broadcast %cst_42 : f32 to vector<16x64xf32>
    %78 = arith.cmpf oge, %30, %77 : vector<16x64xf32>
    %cst_43 = arith.constant 0.000000e+00 : f32
    %79 = vector.broadcast %cst_43 : f32 to vector<16x64xf32>
    %80 = arith.cmpf olt, %32, %79 : vector<16x64xf32>
    %81 = arith.andi %78, %80 : vector<16x64xi1>
    %cst_44 = arith.constant 1.000000e+00 : f32
    %cst_45 = arith.constant 0.000000e+00 : f32
    %82 = vector.broadcast %cst_44 : f32 to vector<16x64xf32>
    %83 = vector.broadcast %cst_45 : f32 to vector<16x64xf32>
    %84 = arith.select %81, %82, %83 : vector<16x64xi1>, vector<16x64xf32>
    %cst_46 = arith.constant 0.000000e+00 : f32
    %85 = vector.broadcast %cst_46 : f32 to vector<16x64xf32>
    %86 = arith.cmpf oge, %32, %85 : vector<16x64xf32>
    %cst_47 = arith.constant 0.000000e+00 : f32
    %87 = vector.broadcast %cst_47 : f32 to vector<16x64xf32>
    %88 = arith.cmpf olt, %34, %87 : vector<16x64xf32>
    %89 = arith.andi %86, %88 : vector<16x64xi1>
    %cst_48 = arith.constant 1.000000e+00 : f32
    %cst_49 = arith.constant 0.000000e+00 : f32
    %90 = vector.broadcast %cst_48 : f32 to vector<16x64xf32>
    %91 = vector.broadcast %cst_49 : f32 to vector<16x64xf32>
    %92 = arith.select %89, %90, %91 : vector<16x64xi1>, vector<16x64xf32>
    %cst_50 = arith.constant 0.000000e+00 : f32
    %93 = vector.broadcast %cst_50 : f32 to vector<16x64xf32>
    %94 = arith.cmpf oge, %34, %93 : vector<16x64xf32>
    %cst_51 = arith.constant 0.000000e+00 : f32
    %95 = vector.broadcast %cst_51 : f32 to vector<16x64xf32>
    %96 = arith.cmpf olt, %36, %95 : vector<16x64xf32>
    %97 = arith.andi %94, %96 : vector<16x64xi1>
    %cst_52 = arith.constant 1.000000e+00 : f32
    %cst_53 = arith.constant 0.000000e+00 : f32
    %98 = vector.broadcast %cst_52 : f32 to vector<16x64xf32>
    %99 = vector.broadcast %cst_53 : f32 to vector<16x64xf32>
    %100 = arith.select %97, %98, %99 : vector<16x64xi1>, vector<16x64xf32>
    %cst_54 = arith.constant 0.000000e+00 : f32
    %101 = vector.broadcast %cst_54 : f32 to vector<16x64xf32>
    %102 = arith.cmpf oge, %36, %101 : vector<16x64xf32>
    %cst_55 = arith.constant 0.000000e+00 : f32
    %103 = vector.broadcast %cst_55 : f32 to vector<16x64xf32>
    %104 = arith.cmpf olt, %38, %103 : vector<16x64xf32>
    %105 = arith.andi %102, %104 : vector<16x64xi1>
    %cst_56 = arith.constant 1.000000e+00 : f32
    %cst_57 = arith.constant 0.000000e+00 : f32
    %106 = vector.broadcast %cst_56 : f32 to vector<16x64xf32>
    %107 = vector.broadcast %cst_57 : f32 to vector<16x64xf32>
    %108 = arith.select %105, %106, %107 : vector<16x64xi1>, vector<16x64xf32>
    %cst_58 = arith.constant 0.000000e+00 : f32
    %109 = vector.broadcast %cst_58 : f32 to vector<16x64xf32>
    %110 = arith.cmpf oge, %38, %109 : vector<16x64xf32>
    %cst_59 = arith.constant 0.000000e+00 : f32
    %111 = vector.broadcast %cst_59 : f32 to vector<16x64xf32>
    %112 = arith.cmpf olt, %40, %111 : vector<16x64xf32>
    %113 = arith.andi %110, %112 : vector<16x64xi1>
    %cst_60 = arith.constant 1.000000e+00 : f32
    %cst_61 = arith.constant 0.000000e+00 : f32
    %114 = vector.broadcast %cst_60 : f32 to vector<16x64xf32>
    %115 = vector.broadcast %cst_61 : f32 to vector<16x64xf32>
    %116 = arith.select %113, %114, %115 : vector<16x64xi1>, vector<16x64xf32>
    %cst_62 = arith.constant 0.000000e+00 : f32
    %117 = vector.broadcast %cst_62 : f32 to vector<16x64xf32>
    %118 = arith.cmpf oge, %40, %117 : vector<16x64xf32>
    %cst_63 = arith.constant 0.000000e+00 : f32
    %119 = vector.broadcast %cst_63 : f32 to vector<16x64xf32>
    %120 = arith.cmpf olt, %42, %119 : vector<16x64xf32>
    %121 = arith.andi %118, %120 : vector<16x64xi1>
    %cst_64 = arith.constant 1.000000e+00 : f32
    %cst_65 = arith.constant 0.000000e+00 : f32
    %122 = vector.broadcast %cst_64 : f32 to vector<16x64xf32>
    %123 = vector.broadcast %cst_65 : f32 to vector<16x64xf32>
    %124 = arith.select %121, %122, %123 : vector<16x64xi1>, vector<16x64xf32>
    %cst_66 = arith.constant 0.000000e+00 : f32
    %125 = vector.broadcast %cst_66 : f32 to vector<16x64xf32>
    %126 = arith.cmpf oge, %42, %125 : vector<16x64xf32>
    %cst_67 = arith.constant 0.000000e+00 : f32
    %127 = vector.broadcast %cst_67 : f32 to vector<16x64xf32>
    %128 = arith.cmpf olt, %44, %127 : vector<16x64xf32>
    %129 = arith.andi %126, %128 : vector<16x64xi1>
    %cst_68 = arith.constant 1.000000e+00 : f32
    %cst_69 = arith.constant 0.000000e+00 : f32
    %130 = vector.broadcast %cst_68 : f32 to vector<16x64xf32>
    %131 = vector.broadcast %cst_69 : f32 to vector<16x64xf32>
    %132 = arith.select %129, %130, %131 : vector<16x64xi1>, vector<16x64xf32>
    %cst_70 = arith.constant 0.000000e+00 : f32
    %133 = vector.broadcast %cst_70 : f32 to vector<16x64xf32>
    %134 = arith.cmpf oge, %44, %133 : vector<16x64xf32>
    %cst_71 = arith.constant 0.000000e+00 : f32
    %135 = vector.broadcast %cst_71 : f32 to vector<16x64xf32>
    %136 = arith.cmpf olt, %46, %135 : vector<16x64xf32>
    %137 = arith.andi %134, %136 : vector<16x64xi1>
    %cst_72 = arith.constant 1.000000e+00 : f32
    %cst_73 = arith.constant 0.000000e+00 : f32
    %138 = vector.broadcast %cst_72 : f32 to vector<16x64xf32>
    %139 = vector.broadcast %cst_73 : f32 to vector<16x64xf32>
    %140 = arith.select %137, %138, %139 : vector<16x64xi1>, vector<16x64xf32>
    %cst_74 = arith.constant 0.000000e+00 : f32
    %141 = vector.broadcast %cst_74 : f32 to vector<16x64xf32>
    %142 = arith.cmpf oge, %46, %141 : vector<16x64xf32>
    %cst_75 = arith.constant 0.000000e+00 : f32
    %143 = vector.broadcast %cst_75 : f32 to vector<16x64xf32>
    %144 = arith.cmpf olt, %48, %143 : vector<16x64xf32>
    %145 = arith.andi %142, %144 : vector<16x64xi1>
    %cst_76 = arith.constant 1.000000e+00 : f32
    %cst_77 = arith.constant 0.000000e+00 : f32
    %146 = vector.broadcast %cst_76 : f32 to vector<16x64xf32>
    %147 = vector.broadcast %cst_77 : f32 to vector<16x64xf32>
    %148 = arith.select %145, %146, %147 : vector<16x64xi1>, vector<16x64xf32>
    %cst_78 = arith.constant 0.000000e+00 : f32
    %149 = vector.broadcast %cst_78 : f32 to vector<16x64xf32>
    %150 = arith.cmpf oge, %48, %149 : vector<16x64xf32>
    %cst_79 = arith.constant 0.000000e+00 : f32
    %151 = vector.broadcast %cst_79 : f32 to vector<16x64xf32>
    %152 = arith.cmpf olt, %50, %151 : vector<16x64xf32>
    %153 = arith.andi %150, %152 : vector<16x64xi1>
    %cst_80 = arith.constant 1.000000e+00 : f32
    %cst_81 = arith.constant 0.000000e+00 : f32
    %154 = vector.broadcast %cst_80 : f32 to vector<16x64xf32>
    %155 = vector.broadcast %cst_81 : f32 to vector<16x64xf32>
    %156 = arith.select %153, %154, %155 : vector<16x64xi1>, vector<16x64xf32>
    %cst_82 = arith.constant 0.000000e+00 : f32
    %157 = vector.broadcast %cst_82 : f32 to vector<16x64xf32>
    %158 = arith.cmpf oge, %50, %157 : vector<16x64xf32>
    %cst_83 = arith.constant 0.000000e+00 : f32
    %159 = vector.broadcast %cst_83 : f32 to vector<16x64xf32>
    %160 = arith.cmpf olt, %52, %159 : vector<16x64xf32>
    %161 = arith.andi %158, %160 : vector<16x64xi1>
    %cst_84 = arith.constant 1.000000e+00 : f32
    %cst_85 = arith.constant 0.000000e+00 : f32
    %162 = vector.broadcast %cst_84 : f32 to vector<16x64xf32>
    %163 = vector.broadcast %cst_85 : f32 to vector<16x64xf32>
    %164 = arith.select %161, %162, %163 : vector<16x64xi1>, vector<16x64xf32>
    %165 = arith.mulf %24, %60 : vector<16x64xf32>
    %166 = arith.mulf %28, %68 : vector<16x64xf32>
    %167 = arith.subf %165, %166 : vector<16x64xf32>
    %cst_86 = arith.constant 1.000000e+00 : f32
    %168 = vector.broadcast %cst_86 : f32 to vector<16x64xf32>
    %169 = arith.mulf %167, %168 : vector<16x64xf32>
    %170 = arith.mulf %26, %68 : vector<16x64xf32>
    %171 = arith.mulf %30, %76 : vector<16x64xf32>
    %172 = arith.subf %170, %171 : vector<16x64xf32>
    %cst_87 = arith.constant 1.000000e+00 : f32
    %173 = vector.broadcast %cst_87 : f32 to vector<16x64xf32>
    %174 = arith.mulf %172, %173 : vector<16x64xf32>
    %175 = arith.mulf %28, %76 : vector<16x64xf32>
    %176 = arith.mulf %32, %84 : vector<16x64xf32>
    %177 = arith.subf %175, %176 : vector<16x64xf32>
    %cst_88 = arith.constant 1.000000e+00 : f32
    %178 = vector.broadcast %cst_88 : f32 to vector<16x64xf32>
    %179 = arith.mulf %177, %178 : vector<16x64xf32>
    %180 = arith.mulf %30, %84 : vector<16x64xf32>
    %181 = arith.mulf %34, %92 : vector<16x64xf32>
    %182 = arith.subf %180, %181 : vector<16x64xf32>
    %cst_89 = arith.constant 1.000000e+00 : f32
    %183 = vector.broadcast %cst_89 : f32 to vector<16x64xf32>
    %184 = arith.mulf %182, %183 : vector<16x64xf32>
    %185 = arith.mulf %32, %92 : vector<16x64xf32>
    %186 = arith.mulf %36, %100 : vector<16x64xf32>
    %187 = arith.subf %185, %186 : vector<16x64xf32>
    %cst_90 = arith.constant 1.000000e+00 : f32
    %188 = vector.broadcast %cst_90 : f32 to vector<16x64xf32>
    %189 = arith.mulf %187, %188 : vector<16x64xf32>
    %190 = arith.mulf %34, %100 : vector<16x64xf32>
    %191 = arith.mulf %38, %108 : vector<16x64xf32>
    %192 = arith.subf %190, %191 : vector<16x64xf32>
    %cst_91 = arith.constant 1.000000e+00 : f32
    %193 = vector.broadcast %cst_91 : f32 to vector<16x64xf32>
    %194 = arith.mulf %192, %193 : vector<16x64xf32>
    %195 = arith.mulf %36, %108 : vector<16x64xf32>
    %196 = arith.mulf %40, %116 : vector<16x64xf32>
    %197 = arith.subf %195, %196 : vector<16x64xf32>
    %cst_92 = arith.constant 1.000000e+00 : f32
    %198 = vector.broadcast %cst_92 : f32 to vector<16x64xf32>
    %199 = arith.mulf %197, %198 : vector<16x64xf32>
    %200 = arith.mulf %38, %116 : vector<16x64xf32>
    %201 = arith.mulf %42, %124 : vector<16x64xf32>
    %202 = arith.subf %200, %201 : vector<16x64xf32>
    %cst_93 = arith.constant 1.000000e+00 : f32
    %203 = vector.broadcast %cst_93 : f32 to vector<16x64xf32>
    %204 = arith.mulf %202, %203 : vector<16x64xf32>
    %205 = arith.mulf %40, %124 : vector<16x64xf32>
    %206 = arith.mulf %44, %132 : vector<16x64xf32>
    %207 = arith.subf %205, %206 : vector<16x64xf32>
    %cst_94 = arith.constant 1.000000e+00 : f32
    %208 = vector.broadcast %cst_94 : f32 to vector<16x64xf32>
    %209 = arith.mulf %207, %208 : vector<16x64xf32>
    %210 = arith.mulf %42, %132 : vector<16x64xf32>
    %211 = arith.mulf %46, %140 : vector<16x64xf32>
    %212 = arith.subf %210, %211 : vector<16x64xf32>
    %cst_95 = arith.constant 1.000000e+00 : f32
    %213 = vector.broadcast %cst_95 : f32 to vector<16x64xf32>
    %214 = arith.mulf %212, %213 : vector<16x64xf32>
    %215 = arith.mulf %44, %140 : vector<16x64xf32>
    %216 = arith.mulf %48, %148 : vector<16x64xf32>
    %217 = arith.subf %215, %216 : vector<16x64xf32>
    %cst_96 = arith.constant 1.000000e+00 : f32
    %218 = vector.broadcast %cst_96 : f32 to vector<16x64xf32>
    %219 = arith.mulf %217, %218 : vector<16x64xf32>
    %220 = arith.mulf %46, %148 : vector<16x64xf32>
    %221 = arith.mulf %50, %156 : vector<16x64xf32>
    %222 = arith.subf %220, %221 : vector<16x64xf32>
    %cst_97 = arith.constant 1.000000e+00 : f32
    %223 = vector.broadcast %cst_97 : f32 to vector<16x64xf32>
    %224 = arith.mulf %222, %223 : vector<16x64xf32>
    %225 = arith.mulf %48, %156 : vector<16x64xf32>
    %226 = arith.mulf %52, %164 : vector<16x64xf32>
    %227 = arith.subf %225, %226 : vector<16x64xf32>
    %cst_98 = arith.constant 1.000000e+00 : f32
    %228 = vector.broadcast %cst_98 : f32 to vector<16x64xf32>
    %229 = arith.mulf %227, %228 : vector<16x64xf32>
    %230 = arith.mulf %24, %169 : vector<16x64xf32>
    %231 = arith.mulf %30, %174 : vector<16x64xf32>
    %232 = arith.subf %230, %231 : vector<16x64xf32>
    %cst_99 = arith.constant 5.000000e-01 : f32
    %233 = vector.broadcast %cst_99 : f32 to vector<16x64xf32>
    %234 = arith.mulf %232, %233 : vector<16x64xf32>
    %235 = arith.mulf %26, %174 : vector<16x64xf32>
    %236 = arith.mulf %32, %179 : vector<16x64xf32>
    %237 = arith.subf %235, %236 : vector<16x64xf32>
    %cst_100 = arith.constant 5.000000e-01 : f32
    %238 = vector.broadcast %cst_100 : f32 to vector<16x64xf32>
    %239 = arith.mulf %237, %238 : vector<16x64xf32>
    %240 = arith.mulf %28, %179 : vector<16x64xf32>
    %241 = arith.mulf %34, %184 : vector<16x64xf32>
    %242 = arith.subf %240, %241 : vector<16x64xf32>
    %cst_101 = arith.constant 5.000000e-01 : f32
    %243 = vector.broadcast %cst_101 : f32 to vector<16x64xf32>
    %244 = arith.mulf %242, %243 : vector<16x64xf32>
    %245 = arith.mulf %30, %184 : vector<16x64xf32>
    %246 = arith.mulf %36, %189 : vector<16x64xf32>
    %247 = arith.subf %245, %246 : vector<16x64xf32>
    %cst_102 = arith.constant 5.000000e-01 : f32
    %248 = vector.broadcast %cst_102 : f32 to vector<16x64xf32>
    %249 = arith.mulf %247, %248 : vector<16x64xf32>
    %250 = arith.mulf %32, %189 : vector<16x64xf32>
    %251 = arith.mulf %38, %194 : vector<16x64xf32>
    %252 = arith.subf %250, %251 : vector<16x64xf32>
    %cst_103 = arith.constant 5.000000e-01 : f32
    %253 = vector.broadcast %cst_103 : f32 to vector<16x64xf32>
    %254 = arith.mulf %252, %253 : vector<16x64xf32>
    %255 = arith.mulf %34, %194 : vector<16x64xf32>
    %256 = arith.mulf %40, %199 : vector<16x64xf32>
    %257 = arith.subf %255, %256 : vector<16x64xf32>
    %cst_104 = arith.constant 5.000000e-01 : f32
    %258 = vector.broadcast %cst_104 : f32 to vector<16x64xf32>
    %259 = arith.mulf %257, %258 : vector<16x64xf32>
    %260 = arith.mulf %36, %199 : vector<16x64xf32>
    %261 = arith.mulf %42, %204 : vector<16x64xf32>
    %262 = arith.subf %260, %261 : vector<16x64xf32>
    %cst_105 = arith.constant 5.000000e-01 : f32
    %263 = vector.broadcast %cst_105 : f32 to vector<16x64xf32>
    %264 = arith.mulf %262, %263 : vector<16x64xf32>
    %265 = arith.mulf %38, %204 : vector<16x64xf32>
    %266 = arith.mulf %44, %209 : vector<16x64xf32>
    %267 = arith.subf %265, %266 : vector<16x64xf32>
    %cst_106 = arith.constant 5.000000e-01 : f32
    %268 = vector.broadcast %cst_106 : f32 to vector<16x64xf32>
    %269 = arith.mulf %267, %268 : vector<16x64xf32>
    %270 = arith.mulf %40, %209 : vector<16x64xf32>
    %271 = arith.mulf %46, %214 : vector<16x64xf32>
    %272 = arith.subf %270, %271 : vector<16x64xf32>
    %cst_107 = arith.constant 5.000000e-01 : f32
    %273 = vector.broadcast %cst_107 : f32 to vector<16x64xf32>
    %274 = arith.mulf %272, %273 : vector<16x64xf32>
    %275 = arith.mulf %42, %214 : vector<16x64xf32>
    %276 = arith.mulf %48, %219 : vector<16x64xf32>
    %277 = arith.subf %275, %276 : vector<16x64xf32>
    %cst_108 = arith.constant 5.000000e-01 : f32
    %278 = vector.broadcast %cst_108 : f32 to vector<16x64xf32>
    %279 = arith.mulf %277, %278 : vector<16x64xf32>
    %280 = arith.mulf %44, %219 : vector<16x64xf32>
    %281 = arith.mulf %50, %224 : vector<16x64xf32>
    %282 = arith.subf %280, %281 : vector<16x64xf32>
    %cst_109 = arith.constant 5.000000e-01 : f32
    %283 = vector.broadcast %cst_109 : f32 to vector<16x64xf32>
    %284 = arith.mulf %282, %283 : vector<16x64xf32>
    %285 = arith.mulf %46, %224 : vector<16x64xf32>
    %286 = arith.mulf %52, %229 : vector<16x64xf32>
    %287 = arith.subf %285, %286 : vector<16x64xf32>
    %cst_110 = arith.constant 5.000000e-01 : f32
    %288 = vector.broadcast %cst_110 : f32 to vector<16x64xf32>
    %289 = arith.mulf %287, %288 : vector<16x64xf32>
    %290 = arith.mulf %24, %234 : vector<16x64xf32>
    %291 = arith.mulf %32, %239 : vector<16x64xf32>
    %292 = arith.subf %290, %291 : vector<16x64xf32>
    %cst_111 = arith.constant 0.333333343 : f32
    %293 = vector.broadcast %cst_111 : f32 to vector<16x64xf32>
    %294 = arith.mulf %292, %293 : vector<16x64xf32>
    %295 = arith.mulf %26, %239 : vector<16x64xf32>
    %296 = arith.mulf %34, %244 : vector<16x64xf32>
    %297 = arith.subf %295, %296 : vector<16x64xf32>
    %cst_112 = arith.constant 0.333333343 : f32
    %298 = vector.broadcast %cst_112 : f32 to vector<16x64xf32>
    %299 = arith.mulf %297, %298 : vector<16x64xf32>
    %300 = arith.mulf %28, %244 : vector<16x64xf32>
    %301 = arith.mulf %36, %249 : vector<16x64xf32>
    %302 = arith.subf %300, %301 : vector<16x64xf32>
    %cst_113 = arith.constant 0.333333343 : f32
    %303 = vector.broadcast %cst_113 : f32 to vector<16x64xf32>
    %304 = arith.mulf %302, %303 : vector<16x64xf32>
    %305 = arith.mulf %30, %249 : vector<16x64xf32>
    %306 = arith.mulf %38, %254 : vector<16x64xf32>
    %307 = arith.subf %305, %306 : vector<16x64xf32>
    %cst_114 = arith.constant 0.333333343 : f32
    %308 = vector.broadcast %cst_114 : f32 to vector<16x64xf32>
    %309 = arith.mulf %307, %308 : vector<16x64xf32>
    %310 = arith.mulf %32, %254 : vector<16x64xf32>
    %311 = arith.mulf %40, %259 : vector<16x64xf32>
    %312 = arith.subf %310, %311 : vector<16x64xf32>
    %cst_115 = arith.constant 0.333333343 : f32
    %313 = vector.broadcast %cst_115 : f32 to vector<16x64xf32>
    %314 = arith.mulf %312, %313 : vector<16x64xf32>
    %315 = arith.mulf %34, %259 : vector<16x64xf32>
    %316 = arith.mulf %42, %264 : vector<16x64xf32>
    %317 = arith.subf %315, %316 : vector<16x64xf32>
    %cst_116 = arith.constant 0.333333343 : f32
    %318 = vector.broadcast %cst_116 : f32 to vector<16x64xf32>
    %319 = arith.mulf %317, %318 : vector<16x64xf32>
    %320 = arith.mulf %36, %264 : vector<16x64xf32>
    %321 = arith.mulf %44, %269 : vector<16x64xf32>
    %322 = arith.subf %320, %321 : vector<16x64xf32>
    %cst_117 = arith.constant 0.333333343 : f32
    %323 = vector.broadcast %cst_117 : f32 to vector<16x64xf32>
    %324 = arith.mulf %322, %323 : vector<16x64xf32>
    %325 = arith.mulf %38, %269 : vector<16x64xf32>
    %326 = arith.mulf %46, %274 : vector<16x64xf32>
    %327 = arith.subf %325, %326 : vector<16x64xf32>
    %cst_118 = arith.constant 0.333333343 : f32
    %328 = vector.broadcast %cst_118 : f32 to vector<16x64xf32>
    %329 = arith.mulf %327, %328 : vector<16x64xf32>
    %330 = arith.mulf %40, %274 : vector<16x64xf32>
    %331 = arith.mulf %48, %279 : vector<16x64xf32>
    %332 = arith.subf %330, %331 : vector<16x64xf32>
    %cst_119 = arith.constant 0.333333343 : f32
    %333 = vector.broadcast %cst_119 : f32 to vector<16x64xf32>
    %334 = arith.mulf %332, %333 : vector<16x64xf32>
    %335 = arith.mulf %42, %279 : vector<16x64xf32>
    %336 = arith.mulf %50, %284 : vector<16x64xf32>
    %337 = arith.subf %335, %336 : vector<16x64xf32>
    %cst_120 = arith.constant 0.333333343 : f32
    %338 = vector.broadcast %cst_120 : f32 to vector<16x64xf32>
    %339 = arith.mulf %337, %338 : vector<16x64xf32>
    %340 = arith.mulf %44, %284 : vector<16x64xf32>
    %341 = arith.mulf %52, %289 : vector<16x64xf32>
    %342 = arith.subf %340, %341 : vector<16x64xf32>
    %cst_121 = arith.constant 0.333333343 : f32
    %343 = vector.broadcast %cst_121 : f32 to vector<16x64xf32>
    %344 = arith.mulf %342, %343 : vector<16x64xf32>
    %345 = arith.negf %18 : vector<16x64xf32>
    %346 = math.exp %345 : vector<16x64xf32>
    %cst_122 = arith.constant 1.000000e+00 : f32
    %347 = vector.broadcast %cst_122 : f32 to vector<16x64xf32>
    %348 = arith.addf %347, %346 : vector<16x64xf32>
    %349 = arith.divf %347, %348 : vector<16x64xf32>
    %350 = arith.mulf %18, %349 : vector<16x64xf32>
    %351 = tpu.concatenate %350, %294, %299, %304, %309, %314, %319, %324, %329, %334, %339, %344 in 1 : vector<16x64xf32>, vector<16x64xf32>, vector<16x64xf32>, vector<16x64xf32>, vector<16x64xf32>, vector<16x64xf32>, vector<16x64xf32>, vector<16x64xf32>, vector<16x64xf32>, vector<16x64xf32>, vector<16x64xf32>, vector<16x64xf32> -> vector<16x768xf32>
    %c0_123 = arith.constant 0 : index
    %c0_124 = arith.constant 0 : index
    %352 = vector.load %arg6[%c0_123, %c0_124] : memref<768x64xf32, #tpu.memory_space<vmem>>, vector<768x64xf32>
    %cst_125 = arith.constant dense<0.000000e+00> : vector<16x64xf32>
    %353 = tpu.matmul %351, %352, %cst_125 {dimension_numbers = #tpu.dot_dimension_numbers<[1], [0], [0], [1], [0, 0, 1, 1], [], []>} : vector<16x768xf32>, vector<768x64xf32>, vector<16x64xf32> -> vector<16x64xf32>
    %c0_126 = arith.constant 0 : index
    %c0_127 = arith.constant 0 : index
    %354 = vector.load %arg7[%c0_126, %c0_127] : memref<64x64xf32, #tpu.memory_space<vmem>>, vector<64x64xf32>
    %cst_128 = arith.constant dense<0.000000e+00> : vector<16x64xf32>
    %355 = tpu.matmul %353, %354, %cst_128 {dimension_numbers = #tpu.dot_dimension_numbers<[1], [0], [0], [1], [0, 0, 1, 1], [], []>} : vector<16x64xf32>, vector<64x64xf32>, vector<16x64xf32> -> vector<16x64xf32>
    %c0_129 = arith.constant 0 : index
    %c0_130 = arith.constant 0 : index
    %356 = vector.load %arg8[%c0_129, %c0_130] : memref<1x64xf32, #tpu.memory_space<vmem>>, vector<1x64xf32>
    %357 = vector.broadcast %356 : vector<1x64xf32> to vector<16x64xf32>
    %358 = arith.addf %355, %357 : vector<16x64xf32>
    %359 = arith.addf %358, %5 : vector<16x64xf32>
    %cst_131 = arith.constant dense<0.000000e+00> : vector<16xf32>
    %360 = vector.multi_reduction <add>, %359, %cst_131 [1] : vector<16x64xf32> to vector<16xf32>
    %361 = vector.shape_cast %360 : vector<16xf32> to vector<16x1xf32>
    %cst_132 = arith.constant 6.400000e+01 : f32
    %362 = vector.broadcast %cst_132 : f32 to vector<16x1xf32>
    %363 = arith.divf %361, %362 : vector<16x1xf32>
    %364 = vector.broadcast %363 : vector<16x1xf32> to vector<16x64xf32>
    %365 = arith.subf %359, %364 : vector<16x64xf32>
    %366 = arith.mulf %365, %365 : vector<16x64xf32>
    %cst_133 = arith.constant dense<0.000000e+00> : vector<16xf32>
    %367 = vector.multi_reduction <add>, %366, %cst_133 [1] : vector<16x64xf32> to vector<16xf32>
    %368 = vector.shape_cast %367 : vector<16xf32> to vector<16x1xf32>
    %cst_134 = arith.constant 6.400000e+01 : f32
    %369 = vector.broadcast %cst_134 : f32 to vector<16x1xf32>
    %370 = arith.divf %368, %369 : vector<16x1xf32>
    %371 = vector.broadcast %363 : vector<16x1xf32> to vector<16x64xf32>
    %372 = arith.subf %359, %371 : vector<16x64xf32>
    %cst_135 = arith.constant 9.99999974E-6 : f32
    %373 = vector.broadcast %cst_135 : f32 to vector<16x1xf32>
    %374 = arith.addf %370, %373 : vector<16x1xf32>
    %375 = math.rsqrt %374 : vector<16x1xf32>
    %376 = vector.broadcast %375 : vector<16x1xf32> to vector<16x64xf32>
    %377 = arith.mulf %372, %376 : vector<16x64xf32>
    %c0_136 = arith.constant 0 : index
    %c0_137 = arith.constant 0 : index
    %378 = vector.load %arg9[%c0_136, %c0_137] : memref<1x64xf32, #tpu.memory_space<vmem>>, vector<1x64xf32>
    %379 = vector.broadcast %378 : vector<1x64xf32> to vector<16x64xf32>
    %380 = arith.mulf %377, %379 : vector<16x64xf32>
    %c0_138 = arith.constant 0 : index
    %c0_139 = arith.constant 0 : index
    %381 = vector.load %arg10[%c0_138, %c0_139] : memref<1x64xf32, #tpu.memory_space<vmem>>, vector<1x64xf32>
    %382 = vector.broadcast %381 : vector<1x64xf32> to vector<16x64xf32>
    %383 = arith.addf %380, %382 : vector<16x64xf32>
    %c0_140 = arith.constant 0 : index
    %c0_141 = arith.constant 0 : index
    %384 = vector.load %arg11[%c0_140, %c0_141] : memref<16x64xf32, #tpu.memory_space<vmem>>, vector<16x64xf32>
    tpu.vector_store %arg11[%c0_140, %c0_141], %383 {strides = array<i32>} : memref<16x64xf32, #tpu.memory_space<vmem>>, vector<16x64xf32>,
    return
  }
  func.func @transform_0(%arg0: i32) -> (i32, i32) {
    %c0_i32 = arith.constant 0 : i32
    %c0_i32_0 = arith.constant 0 : i32
    return %arg0, %c0_i32 : i32, i32
  }
  func.func @transform_1(%arg0: i32) -> (i32, i32) {
    %c0_i32 = arith.constant 0 : i32
    %c0_i32_0 = arith.constant 0 : i32
    %c0_i32_1 = arith.constant 0 : i32
    return %c0_i32, %c0_i32_0 : i32, i32
  }
  func.func @transform_2(%arg0: i32) -> (i32, i32) {
    %c0_i32 = arith.constant 0 : i32
    %c0_i32_0 = arith.constant 0 : i32
    %c0_i32_1 = arith.constant 0 : i32
    return %c0_i32, %c0_i32_0 : i32, i32
  }
  func.func @transform_3(%arg0: i32) -> (i32, i32) {
    %c0_i32 = arith.constant 0 : i32
    %c0_i32_0 = arith.constant 0 : i32
    %c0_i32_1 = arith.constant 0 : i32
    return %c0_i32, %c0_i32_0 : i32, i32
  }
  func.func @transform_4(%arg0: i32) -> (i32, i32) {
    %c0_i32 = arith.constant 0 : i32
    %c0_i32_0 = arith.constant 0 : i32
    %c0_i32_1 = arith.constant 0 : i32
    return %c0_i32, %c0_i32_0 : i32, i32
  }
  func.func @transform_5(%arg0: i32) -> (i32, i32) {
    %c0_i32 = arith.constant 0 : i32
    %c0_i32_0 = arith.constant 0 : i32
    %c0_i32_1 = arith.constant 0 : i32
    return %c0_i32, %c0_i32_0 : i32, i32
  }
  func.func @transform_6(%arg0: i32) -> (i32, i32) {
    %c0_i32 = arith.constant 0 : i32
    %c0_i32_0 = arith.constant 0 : i32
    %c0_i32_1 = arith.constant 0 : i32
    return %c0_i32, %c0_i32_0 : i32, i32
  }
  func.func @transform_7(%arg0: i32) -> (i32, i32) {
    %c0_i32 = arith.constant 0 : i32
    %c0_i32_0 = arith.constant 0 : i32
    %c0_i32_1 = arith.constant 0 : i32
    return %c0_i32, %c0_i32_0 : i32, i32
  }
  func.func @transform_8(%arg0: i32) -> (i32, i32) {
    %c0_i32 = arith.constant 0 : i32
    %c0_i32_0 = arith.constant 0 : i32
    %c0_i32_1 = arith.constant 0 : i32
    return %c0_i32, %c0_i32_0 : i32, i32
  }
  func.func @transform_9(%arg0: i32) -> (i32, i32) {
    %c0_i32 = arith.constant 0 : i32
    %c0_i32_0 = arith.constant 0 : i32
    %c0_i32_1 = arith.constant 0 : i32
    return %c0_i32, %c0_i32_0 : i32, i32
  }
  func.func @transform_10(%arg0: i32) -> (i32, i32) {
    %c0_i32 = arith.constant 0 : i32
    %c0_i32_0 = arith.constant 0 : i32
    return %arg0, %c0_i32 : i32, i32
  }
}

</mosaic_0001>

<llo_original>
// kernel: projection_head.1
$region0: #{projection_head.1}
  #allocation0 [shape = 'u32[]', space=smem, size = 0x4, offset = 0x4, fixed_abs, tag = 'smem constant byte address 0x4 - core index']
  #allocation1 [shape = 'u32[144,128]{1,0:T(1,128)}', space=vmem, size = 0x12000, scoped, tag = 'internal scratch']
  %s0 = inlined_call_operand.vmem [shape: f32[16,32], index: 0, kind: input, shape index: {}]
  %s1 = inlined_call_operand.vmem [shape: f32[32,64], index: 1, kind: input, shape index: {}]
  %s2 = inlined_call_operand.vmem [shape: f32[1,64], index: 2, kind: input, shape index: {}]
  %s3 = inlined_call_operand.vmem [shape: f32[64,64], index: 3, kind: input, shape index: {}]
  %s4 = inlined_call_operand.vmem [shape: f32[1,64], index: 4, kind: input, shape index: {}]
  %s5 = inlined_call_operand.vmem [shape: f32[768,64], index: 5, kind: input, shape index: {}]
  %s6 = inlined_call_operand.vmem [shape: f32[64,64], index: 6, kind: input, shape index: {}]
  %s7 = inlined_call_operand.vmem [shape: f32[1,64], index: 7, kind: input, shape index: {}]
  %s8 = inlined_call_operand.vmem [shape: f32[1,64], index: 8, kind: input, shape index: {}]
  %s9 = inlined_call_operand.vmem [shape: f32[1,64], index: 9, kind: input, shape index: {}]
  %s10 = inlined_call_operand.hbm [shape: f32[16,64], index: 10, kind: output, shape index: {}]
  %s11 = sld [smem:[#allocation0]]
  $region50: #{projection_head.1} parent=0
    _
  %s13 = ssub.s32 1, %s11
  %s14 = scalar_select 0, %s13, %s11
  $region1: #{projection_head.1} parent=0
    #allocation2 [shape = 'u8[8192]{0}', space=vmem, size = 0x2000, scoped, tag = 'output window, operand 0, single buffered']
    #allocation3 [shape = 's32[1]{0}', space=sflag, size = 0x4, scoped, tag = 'scoped memory for projection_head.1']
    %15 = vsyncpa [#allocation3], 0
    // Predicated region
    $region2: #{projection_head.1} parent=1 // pred_check
      _
    $region3: #{projection_head.1} parent=1 // pred_check_branch
      %17 = sbr.rel (0) target = $region5
    $region4: #{projection_head.1} parent=1 // pred_region
      _
    $region5: #{projection_head.1} parent=1 // pred_fallthru
      _
    // Predicated region
    $region6: #{projection_head.1} parent=1 // pred_check
      _
    $region7: #{projection_head.1} parent=1 // pred_check_branch
      %19 = sbr.rel (0) target = $region9
    $region8: #{projection_head.1} parent=1 // pred_region
      _
    $region9: #{projection_head.1} parent=1 // pred_fallthru
      _
    // Predicated region
    $region10: #{projection_head.1} parent=1 // pred_check
      _
    $region11: #{projection_head.1} parent=1 // pred_check_branch
      %21 = sbr.rel (0) target = $region13
    $region12: #{projection_head.1} parent=1 // pred_region
      _
    $region13: #{projection_head.1} parent=1 // pred_fallthru
      _
    // Predicated region
    $region14: #{projection_head.1} parent=1 // pred_check
      _
    $region15: #{projection_head.1} parent=1 // pred_check_branch
      %23 = sbr.rel (0) target = $region17
    $region16: #{projection_head.1} parent=1 // pred_region
      _
    $region17: #{projection_head.1} parent=1 // pred_fallthru
      _
    // Predicated region
    $region18: #{projection_head.1} parent=1 // pred_check
      _
    $region19: #{projection_head.1} parent=1 // pred_check_branch
      %25 = sbr.rel (0) target = $region21
    $region20: #{projection_head.1} parent=1 // pred_region
      _
    $region21: #{projection_head.1} parent=1 // pred_fallthru
      _
    // Predicated region
    $region22: #{projection_head.1} parent=1 // pred_check
      _
    $region23: #{projection_head.1} parent=1 // pred_check_branch
      %27 = sbr.rel (0) target = $region25
    $region24: #{projection_head.1} parent=1 // pred_region
      _
    $region25: #{projection_head.1} parent=1 // pred_fallthru
      _
    // Predicated region
    $region26: #{projection_head.1} parent=1 // pred_check
      _
    $region27: #{projection_head.1} parent=1 // pred_check_branch
      %29 = sbr.rel (0) target = $region29
    $region28: #{projection_head.1} parent=1 // pred_region
      _
    $region29: #{projection_head.1} parent=1 // pred_fallthru
      _
    // Predicated region
    $region30: #{projection_head.1} parent=1 // pred_check
      _
    $region31: #{projection_head.1} parent=1 // pred_check_branch
      %31 = sbr.rel (0) target = $region33
    $region32: #{projection_head.1} parent=1 // pred_region
      _
    $region33: #{projection_head.1} parent=1 // pred_fallthru
      _
    // Predicated region
    $region34: #{projection_head.1} parent=1 // pred_check
      _
    $region35: #{projection_head.1} parent=1 // pred_check_branch
      %33 = sbr.rel (0) target = $region37
    $region36: #{projection_head.1} parent=1 // pred_region
      _
    $region37: #{projection_head.1} parent=1 // pred_fallthru
      _
    // Predicated region
    $region38: #{projection_head.1} parent=1 // pred_check
      _
    $region39: #{projection_head.1} parent=1 // pred_check_branch
      %35 = sbr.rel (0) target = $region41
    $region40: #{projection_head.1} parent=1 // pred_region
      _
    $region41: #{projection_head.1} parent=1 // pred_fallthru
      _
    %v36 = vld [vmem:[%s0] sm:$0xff]
    %v37 = vld [vmem:[%s0 + $0x8] sm:$0xff]
    %v38 = vld [vmem:[%s1] sm:$0xff]
    %v39 = vld [vmem:[%s1 + $0x8] sm:$0xff]
    %v40 = vld [vmem:[%s1 + $0x10] sm:$0xff]
    %v41 = vld [vmem:[%s1 + $0x18] sm:$0xff]
    %v42 = vld [vmem:[%s2] sm:$0x1]
    %v44 = vlaneseq
    %v45 = vshrl.u32 %v44, 7
    %v46 = vsub.s32 0, %v45
    %v47 = vrot.slane %v42, %v46
    %vm49 = vcmask 261120
    %v51 = vsel %vm49, %v36, 0
    %v54 = vsel %vm49, %v37, 0
    %56 = vmatprep.subr.mxu0 0.0
    %57 = vmatpush1.msra.mxu0 %v38
    %58 = vmatprep.subr.mxu0 0.0
    %59 = vmatpush1.msra.mxu0 %v39
    %60 = vmatprep.subr.mxu0 0.0
    %61 = vmatpush1.msra.mxu0 %v40
    %62 = vmatprep.subr.mxu0 0.0
    %63 = vmatpush1.msra.mxu0 %v41
    %64 = vmatprep.subr.mxu0 0.0
    %65 = vmatpush1.msra.mxu0 0.0
    %66 = vmatprep.subr.mxu0 0.0
    %67 = vmatpush1.msra.mxu0 0.0
    %68 = vmatprep.subr.mxu0 0.0
    %69 = vmatpush1.msra.mxu0 0.0
    %70 = vmatprep.subr.mxu0 0.0
    %71 = vmatpush1.msra.mxu0 0.0
    %72 = vmatprep.subr.mxu0 0.0
    %73 = vmatpush1.msra.mxu0 0.0
    %74 = vmatprep.subr.mxu0 0.0
    %75 = vmatpush1.msra.mxu0 0.0
    %76 = vmatprep.subr.mxu0 0.0
    %77 = vmatpush1.msra.mxu0 0.0
    %78 = vmatprep.subr.mxu0 0.0
    %79 = vmatpush1.msra.mxu0 0.0
    %80 = vmatprep.subr.mxu0 0.0
    %81 = vmatpush1.msra.mxu0 0.0
    %82 = vmatprep.subr.mxu0 0.0
    %83 = vmatpush1.msra.mxu0 0.0
    %84 = vmatprep.subr.mxu0 0.0
    %85 = vmatpush1.msra.mxu0 0.0
    %86 = vmatprep.subr.mxu0 0.0
    %87 = vmatpush1.msra.mxu0 0.0
    %88 = vmatprep.subr.mxu0 0.0
    %89 = vmatpush1.msra.mxu0 0.0
    %90 = vmatprep.subr.mxu0 0.0
    %91 = vmatpush1.msra.mxu0 0.0
    %92 = vmatprep.subr.mxu0 0.0
    %93 = vmatpush1.msra.mxu0 0.0
    %94 = vmatprep.subr.mxu0 0.0
    %95 = vmatpush1.msra.mxu0 0.0
    %96 = vmatprep.subr.mxu0 0.0
    %97 = vmatpush1.msra.mxu0 0.0
    %98 = vmatprep.subr.mxu0 0.0
    %99 = vmatpush1.msra.mxu0 0.0
    %100 = vmatprep.subr.mxu0 0.0
    %101 = vmatpush1.msra.mxu0 0.0
    %102 = vmatprep.subr.mxu0 0.0
    %103 = vmatpush1.msra.mxu0 0.0
    %104 = vmatprep.subr.mxu0 0.0
    %105 = vmatpush1.msra.mxu0 0.0
    %106 = vmatprep.subr.mxu0 0.0
    %107 = vmatpush1.msra.mxu0 0.0
    %108 = vmatprep.subr.mxu0 0.0
    %109 = vmatpush1.msra.mxu0 0.0
    %110 = vmatprep.subr.mxu0 0.0
    %111 = vmatpush1.msra.mxu0 0.0
    %112 = vmatprep.subr.mxu0 0.0
    %113 = vmatpush1.msra.mxu0 0.0
    %114 = vmatprep.subr.mxu0 0.0
    %115 = vmatpush1.msra.mxu0 0.0
    %116 = vmatprep.subr.mxu0 0.0
    %117 = vmatpush1.msra.mxu0 0.0
    %118 = vmatprep.subr.mxu0 0.0
    %119 = vmatpush1.msra.mxu0 0.0
    %120 = vmatprep.mubr.f32.mxu0 0.0
    %121 = vmatmul.mubr.f32.gmra.mrb[0].mxu0 %v51
    %v122 = vpop.f32.mrb[0].mxu0
    %v123 = vadd.f32 %v47, %v122
    %v124 = vpop.f32.mrb[0].mxu0
    %125 = vmatprep.mubr.f32.mxu0 0.0
    %126 = vmatmul.mubr.f32.gmra.mrb[0].mxu0 %v54
    %v127 = vpop.f32.mrb[0].mxu0
    %v128 = vadd.f32 %v47, %v127
    %v129 = vpop.f32.mrb[0].mxu0
    %130 = vdwg.mxu0
    %v131 = vmul.f32 %v123, 0.5
    %v132 = vmul.f32 %v128, 0.5
    %v133 = vmul.f32 %v123, 0.70710677
    %v134 = vmul.f32 %v128, 0.70710677
    %v135 = verf.f32.pop %v133
    %v136 = verf.f32.pop %v134
    %v137 = vadd.f32 %v135, 1.0
    %v138 = vadd.f32 %v136, 1.0
    %v139 = vmul.f32 %v131, %v137
    %v140 = vmul.f32 %v132, %v138
    %v141 = vld [vmem:[%s3] sm:$0xff]
    %v142 = vld [vmem:[%s3 + $0x8] sm:$0xff]
    %v143 = vld [vmem:[%s3 + $0x10] sm:$0xff]
    %v144 = vld [vmem:[%s3 + $0x18] sm:$0xff]
    %v145 = vld [vmem:[%s3 + $0x20] sm:$0xff]
    %v146 = vld [vmem:[%s3 + $0x28] sm:$0xff]
    %v147 = vld [vmem:[%s3 + $0x30] sm:$0xff]
    %v148 = vld [vmem:[%s3 + $0x38] sm:$0xff]
    %v149 = vld [vmem:[%s4] sm:$0x1]
    %v151 = vlaneseq
    %v152 = vshrl.u32 %v151, 7
    %v153 = vsub.s32 0, %v152
    %v154 = vrot.slane %v149, %v153
    %vm156 = vcmask 523264
    %v158 = vsel %vm156, %v139, 0
    %v161 = vsel %vm156, %v140, 0
    %163 = vmatprep.subr.mxu0 0.0
    %164 = vmatpush1.msra.mxu0 %v141
    %165 = vmatprep.subr.mxu0 0.0
    %166 = vmatpush1.msra.mxu0 %v142
    %167 = vmatprep.subr.mxu0 0.0
    %168 = vmatpush1.msra.mxu0 %v143
    %169 = vmatprep.subr.mxu0 0.0
    %170 = vmatpush1.msra.mxu0 %v144
    %171 = vmatprep.subr.mxu0 0.0
    %172 = vmatpush1.msra.mxu0 %v145
    %173 = vmatprep.subr.mxu0 0.0
    %174 = vmatpush1.msra.mxu0 %v146
    %175 = vmatprep.subr.mxu0 0.0
    %176 = vmatpush1.msra.mxu0 %v147
    %177 = vmatprep.subr.mxu0 0.0
    %178 = vmatpush1.msra.mxu0 %v148
    %179 = vmatprep.subr.mxu0 0.0
    %180 = vmatpush1.msra.mxu0 0.0
    %181 = vmatprep.subr.mxu0 0.0
    %182 = vmatpush1.msra.mxu0 0.0
    %183 = vmatprep.subr.mxu0 0.0
    %184 = vmatpush1.msra.mxu0 0.0
    %185 = vmatprep.subr.mxu0 0.0
    %186 = vmatpush1.msra.mxu0 0.0
    %187 = vmatprep.subr.mxu0 0.0
    %188 = vmatpush1.msra.mxu0 0.0
    %189 = vmatprep.subr.mxu0 0.0
    %190 = vmatpush1.msra.mxu0 0.0
    %191 = vmatprep.subr.mxu0 0.0
    %192 = vmatpush1.msra.mxu0 0.0
    %193 = vmatprep.subr.mxu0 0.0
    %194 = vmatpush1.msra.mxu0 0.0
    %195 = vmatprep.subr.mxu0 0.0
    %196 = vmatpush1.msra.mxu0 0.0
    %197 = vmatprep.subr.mxu0 0.0
    %198 = vmatpush1.msra.mxu0 0.0
    %199 = vmatprep.subr.mxu0 0.0
    %200 = vmatpush1.msra.mxu0 0.0
    %201 = vmatprep.subr.mxu0 0.0
    %202 = vmatpush1.msra.mxu0 0.0
    %203 = vmatprep.subr.mxu0 0.0
    %204 = vmatpush1.msra.mxu0 0.0
    %205 = vmatprep.subr.mxu0 0.0
    %206 = vmatpush1.msra.mxu0 0.0
    %207 = vmatprep.subr.mxu0 0.0
    %208 = vmatpush1.msra.mxu0 0.0
    %209 = vmatprep.subr.mxu0 0.0
    %210 = vmatpush1.msra.mxu0 0.0
    %211 = vmatprep.subr.mxu0 0.0
    %212 = vmatpush1.msra.mxu0 0.0
    %213 = vmatprep.subr.mxu0 0.0
    %214 = vmatpush1.msra.mxu0 0.0
    %215 = vmatprep.subr.mxu0 0.0
    %216 = vmatpush1.msra.mxu0 0.0
    %217 = vmatprep.subr.mxu0 0.0
    %218 = vmatpush1.msra.mxu0 0.0
    %219 = vmatprep.subr.mxu0 0.0
    %220 = vmatpush1.msra.mxu0 0.0
    %221 = vmatprep.subr.mxu0 0.0
    %222 = vmatpush1.msra.mxu0 0.0
    %223 = vmatprep.subr.mxu0 0.0
    %224 = vmatpush1.msra.mxu0 0.0
    %225 = vmatprep.subr.mxu0 0.0
    %226 = vmatpush1.msra.mxu0 0.0
    %227 = vmatprep.mubr.f32.mxu0 0.0
    %228 = vmatmul.mubr.f32.gmra.mrb[0].mxu0 %v158
    %v229 = vpop.f32.mrb[0].mxu0
    %v230 = vadd.f32 %v154, %v229
    %v231 = vpop.f32.mrb[0].mxu0
    %232 = vmatprep.mubr.f32.mxu0 0.0
    %233 = vmatmul.mubr.f32.gmra.mrb[0].mxu0 %v161
    %v234 = vpop.f32.mrb[0].mxu0
    %v235 = vadd.f32 %v154, %v234
    %v236 = vpop.f32.mrb[0].mxu0
    %237 = vdwg.mxu0
    %v238 = vadd.f32 %v230, 1.0
    %v239 = vadd.f32 %v235, 1.0
    %v240 = vmul.f32 %v238, 4.0
    %v241 = vmul.f32 %v239, 4.0
    %v242 = vsub.f32 %v240, -3.0
    %v243 = vsub.f32 %v241, -3.0
    %v244 = vsub.f32 %v240, -2.0
    %v245 = vsub.f32 %v241, -2.0
    %v246 = vsub.f32 %v240, -1.0
    %v247 = vsub.f32 %v241, -1.0
    %v248 = vsub.f32 %v240, 1.0
    %v249 = vsub.f32 %v241, 1.0
    %v250 = vsub.f32 %v240, 2.0
    %v251 = vsub.f32 %v241, 2.0
    %v252 = vsub.f32 %v240, 3.0
    %v253 = vsub.f32 %v241, 3.0
    %v254 = vsub.f32 %v240, 4.0
    %v255 = vsub.f32 %v241, 4.0
    %v256 = vsub.f32 %v240, 5.0
    %v257 = vsub.f32 %v241, 5.0
    %v258 = vsub.f32 %v240, 6.0
    %v259 = vsub.f32 %v241, 6.0
    %v260 = vsub.f32 %v240, 7.0
    %v261 = vsub.f32 %v241, 7.0
    %v262 = vsub.f32 %v240, 8.0
    %v263 = vsub.f32 %v241, 8.0
    %v264 = vsub.f32 %v240, 9.0
    %v265 = vsub.f32 %v241, 9.0
    %v266 = vsub.f32 %v240, 10.0
    %v267 = vsub.f32 %v241, 10.0
    %v268 = vsub.f32 %v240, 11.0
    %v269 = vsub.f32 %v241, 11.0
    %vm270 = vcmp.ge.f32.partialorder %v242, 0.0
    %vm271 = vcmp.ge.f32.partialorder %v243, 0.0
    %vm272 = vcmp.lt.f32.partialorder %v244, 0.0
    %vm273 = vcmp.lt.f32.partialorder %v245, 0.0
    %vm274 = vmand %vm270, %vm272
    %vm275 = vmand %vm271, %vm273
    %v276 = vsel %vm274, 1.0, 0.0
    %v277 = vsel %vm275, 1.0, 0.0
    %vm278 = vcmp.ge.f32.partialorder %v244, 0.0
    %vm279 = vcmp.ge.f32.partialorder %v245, 0.0
    %vm280 = vcmp.lt.f32.partialorder %v246, 0.0
    %vm281 = vcmp.lt.f32.partialorder %v247, 0.0
    %vm282 = vmand %vm278, %vm280
    %vm283 = vmand %vm279, %vm281
    %v284 = vsel %vm282, 1.0, 0.0
    %v285 = vsel %vm283, 1.0, 0.0
    %vm286 = vcmp.ge.f32.partialorder %v246, 0.0
    %vm287 = vcmp.ge.f32.partialorder %v247, 0.0
    %vm288 = vcmp.lt.f32.partialorder %v240, 0.0
    %vm289 = vcmp.lt.f32.partialorder %v241, 0.0
    %vm290 = vmand %vm286, %vm288
    %vm291 = vmand %vm287, %vm289
    %v292 = vsel %vm290, 1.0, 0.0
    %v293 = vsel %vm291, 1.0, 0.0
    %vm294 = vcmp.ge.f32.partialorder %v240, 0.0
    %vm295 = vcmp.ge.f32.partialorder %v241, 0.0
    %vm296 = vcmp.lt.f32.partialorder %v248, 0.0
    %vm297 = vcmp.lt.f32.partialorder %v249, 0.0
    %vm298 = vmand %vm294, %vm296
    %vm299 = vmand %vm295, %vm297
    %v300 = vsel %vm298, 1.0, 0.0
    %v301 = vsel %vm299, 1.0, 0.0
    %vm302 = vcmp.ge.f32.partialorder %v248, 0.0
    %vm303 = vcmp.ge.f32.partialorder %v249, 0.0
    %vm304 = vcmp.lt.f32.partialorder %v250, 0.0
    %vm305 = vcmp.lt.f32.partialorder %v251, 0.0
    %vm306 = vmand %vm302, %vm304
    %vm307 = vmand %vm303, %vm305
    %v308 = vsel %vm306, 1.0, 0.0
    %v309 = vsel %vm307, 1.0, 0.0
    %vm310 = vcmp.ge.f32.partialorder %v250, 0.0
    %vm311 = vcmp.ge.f32.partialorder %v251, 0.0
    %vm312 = vcmp.lt.f32.partialorder %v252, 0.0
    %vm313 = vcmp.lt.f32.partialorder %v253, 0.0
    %vm314 = vmand %vm310, %vm312
    %vm315 = vmand %vm311, %vm313
    %v316 = vsel %vm314, 1.0, 0.0
    %v317 = vsel %vm315, 1.0, 0.0
    %vm318 = vcmp.ge.f32.partialorder %v252, 0.0
    %vm319 = vcmp.ge.f32.partialorder %v253, 0.0
    %vm320 = vcmp.lt.f32.partialorder %v254, 0.0
    %vm321 = vcmp.lt.f32.partialorder %v255, 0.0
    %vm322 = vmand %vm318, %vm320
    %vm323 = vmand %vm319, %vm321
    %v324 = vsel %vm322, 1.0, 0.0
    %v325 = vsel %vm323, 1.0, 0.0
    %vm326 = vcmp.ge.f32.partialorder %v254, 0.0
    %vm327 = vcmp.ge.f32.partialorder %v255, 0.0
    %vm328 = vcmp.lt.f32.partialorder %v256, 0.0
    %vm329 = vcmp.lt.f32.partialorder %v257, 0.0
    %vm330 = vmand %vm326, %vm328
    %vm331 = vmand %vm327, %vm329
    %v332 = vsel %vm330, 1.0, 0.0
    %v333 = vsel %vm331, 1.0, 0.0
    %vm334 = vcmp.ge.f32.partialorder %v256, 0.0
    %vm335 = vcmp.ge.f32.partialorder %v257, 0.0
    %vm336 = vcmp.lt.f32.partialorder %v258, 0.0
    %vm337 = vcmp.lt.f32.partialorder %v259, 0.0
    %vm338 = vmand %vm334, %vm336
    %vm339 = vmand %vm335, %vm337
    %v340 = vsel %vm338, 1.0, 0.0
    %v341 = vsel %vm339, 1.0, 0.0
    %vm342 = vcmp.ge.f32.partialorder %v258, 0.0
    %vm343 = vcmp.ge.f32.partialorder %v259, 0.0
    %vm344 = vcmp.lt.f32.partialorder %v260, 0.0
    %vm345 = vcmp.lt.f32.partialorder %v261, 0.0
    %vm346 = vmand %vm342, %vm344
    %vm347 = vmand %vm343, %vm345
    %v348 = vsel %vm346, 1.0, 0.0
    %v349 = vsel %vm347, 1.0, 0.0
    %vm350 = vcmp.ge.f32.partialorder %v260, 0.0
    %vm351 = vcmp.ge.f32.partialorder %v261, 0.0
    %vm352 = vcmp.lt.f32.partialorder %v262, 0.0
    %vm353 = vcmp.lt.f32.partialorder %v263, 0.0
    %vm354 = vmand %vm350, %vm352
    %vm355 = vmand %vm351, %vm353
    %v356 = vsel %vm354, 1.0, 0.0
    %v357 = vsel %vm355, 1.0, 0.0
    %vm358 = vcmp.ge.f32.partialorder %v262, 0.0
    %vm359 = vcmp.ge.f32.partialorder %v263, 0.0
    %vm360 = vcmp.lt.f32.partialorder %v264, 0.0
    %vm361 = vcmp.lt.f32.partialorder %v265, 0.0
    %vm362 = vmand %vm358, %vm360
    %vm363 = vmand %vm359, %vm361
    %v364 = vsel %vm362, 1.0, 0.0
    %v365 = vsel %vm363, 1.0, 0.0
    %vm366 = vcmp.ge.f32.partialorder %v264, 0.0
    %vm367 = vcmp.ge.f32.partialorder %v265, 0.0
    %vm368 = vcmp.lt.f32.partialorder %v266, 0.0
    %vm369 = vcmp.lt.f32.partialorder %v267, 0.0
    %vm370 = vmand %vm366, %vm368
    %vm371 = vmand %vm367, %vm369
    %v372 = vsel %vm370, 1.0, 0.0
    %v373 = vsel %vm371, 1.0, 0.0
    %vm374 = vcmp.ge.f32.partialorder %v266, 0.0
    %vm375 = vcmp.ge.f32.partialorder %v267, 0.0
    %vm376 = vcmp.lt.f32.partialorder %v268, 0.0
    %vm377 = vcmp.lt.f32.partialorder %v269, 0.0
    %vm378 = vmand %vm374, %vm376
    %vm379 = vmand %vm375, %vm377
    %v380 = vsel %vm378, 1.0, 0.0
    %v381 = vsel %vm379, 1.0, 0.0
    %v382 = vmul.f32 %v242, %v276
    %v383 = vmul.f32 %v243, %v277
    %v384 = vmul.f32 %v246, %v284
    %v385 = vmul.f32 %v247, %v285
    %v386 = vsub.f32 %v382, %v384
    %v387 = vsub.f32 %v383, %v385
    %v388 = vmul.f32 %v244, %v284
    %v389 = vmul.f32 %v245, %v285
    %v390 = vmul.f32 %v240, %v292
    %v391 = vmul.f32 %v241, %v293
    %v392 = vsub.f32 %v388, %v390
    %v393 = vsub.f32 %v389, %v391
    %v394 = vmul.f32 %v246, %v292
    %v395 = vmul.f32 %v247, %v293
    %v396 = vmul.f32 %v248, %v300
    %v397 = vmul.f32 %v249, %v301
    %v398 = vsub.f32 %v394, %v396
    %v399 = vsub.f32 %v395, %v397
    %v400 = vmul.f32 %v240, %v300
    %v401 = vmul.f32 %v241, %v301
    %v402 = vmul.f32 %v250, %v308
    %v403 = vmul.f32 %v251, %v309
    %v404 = vsub.f32 %v400, %v402
    %v405 = vsub.f32 %v401, %v403
    %v406 = vmul.f32 %v248, %v308
    %v407 = vmul.f32 %v249, %v309
    %v408 = vmul.f32 %v252, %v316
    %v409 = vmul.f32 %v253, %v317
    %v410 = vsub.f32 %v406, %v408
    %v411 = vsub.f32 %v407, %v409
    %v412 = vmul.f32 %v250, %v316
    %v413 = vmul.f32 %v251, %v317
    %v414 = vmul.f32 %v254, %v324
    %v415 = vmul.f32 %v255, %v325
    %v416 = vsub.f32 %v412, %v414
    %v417 = vsub.f32 %v413, %v415
    %v418 = vmul.f32 %v252, %v324
    %v419 = vmul.f32 %v253, %v325
    %v420 = vmul.f32 %v256, %v332
    %v421 = vmul.f32 %v257, %v333
    %v422 = vsub.f32 %v418, %v420
    %v423 = vsub.f32 %v419, %v421
    %v424 = vmul.f32 %v254, %v332
    %v425 = vmul.f32 %v255, %v333
    %v426 = vmul.f32 %v258, %v340
    %v427 = vmul.f32 %v259, %v341
    %v428 = vsub.f32 %v424, %v426
    %v429 = vsub.f32 %v425, %v427
    %v430 = vmul.f32 %v256, %v340
    %v431 = vmul.f32 %v257, %v341
    %v432 = vmul.f32 %v260, %v348
    %v433 = vmul.f32 %v261, %v349
    %v434 = vsub.f32 %v430, %v432
    %v435 = vsub.f32 %v431, %v433
    %v436 = vmul.f32 %v258, %v348
    %v437 = vmul.f32 %v259, %v349
    %v438 = vmul.f32 %v262, %v356
    %v439 = vmul.f32 %v263, %v357
    %v440 = vsub.f32 %v436, %v438
    %v441 = vsub.f32 %v437, %v439
    %v442 = vmul.f32 %v260, %v356
    %v443 = vmul.f32 %v261, %v357
    %v444 = vmul.f32 %v264, %v364
    %v445 = vmul.f32 %v265, %v365
    %v446 = vsub.f32 %v442, %v444
    %v447 = vsub.f32 %v443, %v445
    %v448 = vmul.f32 %v262, %v364
    %v449 = vmul.f32 %v263, %v365
    %v450 = vmul.f32 %v266, %v372
    %v451 = vmul.f32 %v267, %v373
    %v452 = vsub.f32 %v448, %v450
    %v453 = vsub.f32 %v449, %v451
    %v454 = vmul.f32 %v264, %v372
    %v455 = vmul.f32 %v265, %v373
    %v456 = vmul.f32 %v268, %v380
    %v457 = vmul.f32 %v269, %v381
    %v458 = vsub.f32 %v454, %v456
    %v459 = vsub.f32 %v455, %v457
    %v460 = vmul.f32 %v242, %v386
    %v461 = vmul.f32 %v243, %v387
    %v462 = vmul.f32 %v240, %v392
    %v463 = vmul.f32 %v241, %v393
    %v464 = vsub.f32 %v460, %v462
    %v465 = vsub.f32 %v461, %v463
    %v466 = vmul.f32 %v464, 0.5
    %v467 = vmul.f32 %v465, 0.5
    %v468 = vmul.f32 %v244, %v392
    %v469 = vmul.f32 %v245, %v393
    %v470 = vmul.f32 %v248, %v398
    %v471 = vmul.f32 %v249, %v399
    %v472 = vsub.f32 %v468, %v470
    %v473 = vsub.f32 %v469, %v471
    %v474 = vmul.f32 %v472, 0.5
    %v475 = vmul.f32 %v473, 0.5
    %v476 = vmul.f32 %v246, %v398
    %v477 = vmul.f32 %v247, %v399
    %v478 = vmul.f32 %v250, %v404
    %v479 = vmul.f32 %v251, %v405
    %v480 = vsub.f32 %v476, %v478
    %v481 = vsub.f32 %v477, %v479
    %v482 = vmul.f32 %v480, 0.5
    %v483 = vmul.f32 %v481, 0.5
    %v484 = vmul.f32 %v240, %v404
    %v485 = vmul.f32 %v241, %v405
    %v486 = vmul.f32 %v252, %v410
    %v487 = vmul.f32 %v253, %v411
    %v488 = vsub.f32 %v484, %v486
    %v489 = vsub.f32 %v485, %v487
    %v490 = vmul.f32 %v488, 0.5
    %v491 = vmul.f32 %v489, 0.5
    %v492 = vmul.f32 %v248, %v410
    %v493 = vmul.f32 %v249, %v411
    %v494 = vmul.f32 %v254, %v416
    %v495 = vmul.f32 %v255, %v417
    %v496 = vsub.f32 %v492, %v494
    %v497 = vsub.f32 %v493, %v495
    %v498 = vmul.f32 %v496, 0.5
    %v499 = vmul.f32 %v497, 0.5
    %v500 = vmul.f32 %v250, %v416
    %v501 = vmul.f32 %v251, %v417
    %v502 = vmul.f32 %v256, %v422
    %v503 = vmul.f32 %v257, %v423
    %v504 = vsub.f32 %v500, %v502
    %v505 = vsub.f32 %v501, %v503
    %v506 = vmul.f32 %v504, 0.5
    %v507 = vmul.f32 %v505, 0.5
    %v508 = vmul.f32 %v252, %v422
    %v509 = vmul.f32 %v253, %v423
    %v510 = vmul.f32 %v258, %v428
    %v511 = vmul.f32 %v259, %v429
    %v512 = vsub.f32 %v508, %v510
    %v513 = vsub.f32 %v509, %v511
    %v514 = vmul.f32 %v512, 0.5
    %v515 = vmul.f32 %v513, 0.5
    %v516 = vmul.f32 %v254, %v428
    %v517 = vmul.f32 %v255, %v429
    %v518 = vmul.f32 %v260, %v434
    %v519 = vmul.f32 %v261, %v435
    %v520 = vsub.f32 %v516, %v518
    %v521 = vsub.f32 %v517, %v519
    %v522 = vmul.f32 %v520, 0.5
    %v523 = vmul.f32 %v521, 0.5
    %v524 = vmul.f32 %v256, %v434
    %v525 = vmul.f32 %v257, %v435
    %v526 = vmul.f32 %v262, %v440
    %v527 = vmul.f32 %v263, %v441
    %v528 = vsub.f32 %v524, %v526
    %v529 = vsub.f32 %v525, %v527
    %v530 = vmul.f32 %v528, 0.5
    %v531 = vmul.f32 %v529, 0.5
    %v532 = vmul.f32 %v258, %v440
    %v533 = vmul.f32 %v259, %v441
    %v534 = vmul.f32 %v264, %v446
    %v535 = vmul.f32 %v265, %v447
    %v536 = vsub.f32 %v532, %v534
    %v537 = vsub.f32 %v533, %v535
    %v538 = vmul.f32 %v536, 0.5
    %v539 = vmul.f32 %v537, 0.5
    %v540 = vmul.f32 %v260, %v446
    %v541 = vmul.f32 %v261, %v447
    %v542 = vmul.f32 %v266, %v452
    %v543 = vmul.f32 %v267, %v453
    %v544 = vsub.f32 %v540, %v542
    %v545 = vsub.f32 %v541, %v543
    %v546 = vmul.f32 %v544, 0.5
    %v547 = vmul.f32 %v545, 0.5
    %v548 = vmul.f32 %v262, %v452
    %v549 = vmul.f32 %v263, %v453
    %v550 = vmul.f32 %v268, %v458
    %v551 = vmul.f32 %v269, %v459
    %v552 = vsub.f32 %v548, %v550
    %v553 = vsub.f32 %v549, %v551
    %v554 = vmul.f32 %v552, 0.5
    %v555 = vmul.f32 %v553, 0.5
    %v556 = vmul.f32 %v242, %v466
    %v557 = vmul.f32 %v243, %v467
    %v558 = vmul.f32 %v248, %v474
    %v559 = vmul.f32 %v249, %v475
    %v560 = vsub.f32 %v556, %v558
    %v561 = vsub.f32 %v557, %v559
    %v562 = vmul.f32 %v560, 0.33333334
    %v563 = vmul.f32 %v561, 0.33333334
    %v564 = vmul.f32 %v244, %v474
    %v565 = vmul.f32 %v245, %v475
    %v566 = vmul.f32 %v250, %v482
    %v567 = vmul.f32 %v251, %v483
    %v568 = vsub.f32 %v564, %v566
    %v569 = vsub.f32 %v565, %v567
    %v570 = vmul.f32 %v568, 0.33333334
    %v571 = vmul.f32 %v569, 0.33333334
    %v572 = vmul.f32 %v246, %v482
    %v573 = vmul.f32 %v247, %v483
    %v574 = vmul.f32 %v252, %v490
    %v575 = vmul.f32 %v253, %v491
    %v576 = vsub.f32 %v572, %v574
    %v577 = vsub.f32 %v573, %v575
    %v578 = vmul.f32 %v576, 0.33333334
    %v579 = vmul.f32 %v577, 0.33333334
    %v580 = vmul.f32 %v240, %v490
    %v581 = vmul.f32 %v241, %v491
    %v582 = vmul.f32 %v254, %v498
    %v583 = vmul.f32 %v255, %v499
    %v584 = vsub.f32 %v580, %v582
    %v585 = vsub.f32 %v581, %v583
    %v586 = vmul.f32 %v584, 0.33333334
    %v587 = vmul.f32 %v585, 0.33333334
    %v588 = vmul.f32 %v248, %v498
    %v589 = vmul.f32 %v249, %v499
    %v590 = vmul.f32 %v256, %v506
    %v591 = vmul.f32 %v257, %v507
    %v592 = vsub.f32 %v588, %v590
    %v593 = vsub.f32 %v589, %v591
    %v594 = vmul.f32 %v592, 0.33333334
    %v595 = vmul.f32 %v593, 0.33333334
    %v596 = vmul.f32 %v250, %v506
    %v597 = vmul.f32 %v251, %v507
    %v598 = vmul.f32 %v258, %v514
    %v599 = vmul.f32 %v259, %v515
    %v600 = vsub.f32 %v596, %v598
    %v601 = vsub.f32 %v597, %v599
    %v602 = vmul.f32 %v600, 0.33333334
    %v603 = vmul.f32 %v601, 0.33333334
    %v604 = vmul.f32 %v252, %v514
    %v605 = vmul.f32 %v253, %v515
    %v606 = vmul.f32 %v260, %v522
    %v607 = vmul.f32 %v261, %v523
    %v608 = vsub.f32 %v604, %v606
    %v609 = vsub.f32 %v605, %v607
    %v610 = vmul.f32 %v608, 0.33333334
    %v611 = vmul.f32 %v609, 0.33333334
    %v612 = vmul.f32 %v254, %v522
    %v613 = vmul.f32 %v255, %v523
    %v614 = vmul.f32 %v262, %v530
    %v615 = vmul.f32 %v263, %v531
    %v616 = vsub.f32 %v612, %v614
    %v617 = vsub.f32 %v613, %v615
    %v618 = vmul.f32 %v616, 0.33333334
    %v619 = vmul.f32 %v617, 0.33333334
    %v620 = vmul.f32 %v256, %v530
    %v621 = vmul.f32 %v257, %v531
    %v622 = vmul.f32 %v264, %v538
    %v623 = vmul.f32 %v265, %v539
    %v624 = vsub.f32 %v620, %v622
    %v625 = vsub.f32 %v621, %v623
    %v626 = vmul.f32 %v624, 0.33333334
    %v627 = vmul.f32 %v625, 0.33333334
    %v628 = vmul.f32 %v258, %v538
    %v629 = vmul.f32 %v259, %v539
    %v630 = vmul.f32 %v266, %v546
    %v631 = vmul.f32 %v267, %v547
    %v632 = vsub.f32 %v628, %v630
    %v633 = vsub.f32 %v629, %v631
    %v634 = vmul.f32 %v632, 0.33333334
    %v635 = vmul.f32 %v633, 0.33333334
    %v636 = vmul.f32 %v260, %v546
    %v637 = vmul.f32 %v261, %v547
    %v638 = vmul.f32 %v268, %v554
    %v639 = vmul.f32 %v269, %v555
    %v640 = vsub.f32 %v636, %v638
    %v641 = vsub.f32 %v637, %v639
    %v642 = vmul.f32 %v640, 0.33333334
    %v643 = vmul.f32 %v641, 0.33333334
    %v644 = vxor.u32 %v230, 2147483648
    %v645 = vxor.u32 %v235, 2147483648
    %v646 = vmul.f32 %v644, 1.442695
    %v647 = vpow.pop %v646
    %v648 = vmul.f32 %v645, 1.442695
    %v649 = vpow.pop %v648
    %v650 = vadd.f32 %v647, 1.0
    %v651 = vadd.f32 %v649, 1.0
    %v652 = vrcp.pop %v650
    %v653 = vmul.f32 1.0, %v652
    %v654 = vrcp.pop %v651
    %v655 = vmul.f32 1.0, %v654
    %v656 = vmul.f32 %v230, %v653
    %v657 = vmul.f32 %v235, %v655
    %660 = vrot.lane.b32.xlu0 %v562, 64
    %v661 = vpop.permute.xlu0 %660
    %662 = vrot.lane.b32.xlu0 %v563, 64
    %v663 = vpop.permute.xlu0 %662
    %668 = vrot.lane.b32.xlu0 %v578, 64
    %v669 = vpop.permute.xlu0 %668
    %670 = vrot.lane.b32.xlu0 %v579, 64
    %v671 = vpop.permute.xlu0 %670
    %676 = vrot.lane.b32.xlu0 %v594, 64
    %v677 = vpop.permute.xlu0 %676
    %678 = vrot.lane.b32.xlu0 %v595, 64
    %v679 = vpop.permute.xlu0 %678
    %684 = vrot.lane.b32.xlu0 %v610, 64
    %v685 = vpop.permute.xlu0 %684
    %686 = vrot.lane.b32.xlu0 %v611, 64
    %v687 = vpop.permute.xlu0 %686
    %692 = vrot.lane.b32.xlu0 %v626, 64
    %v693 = vpop.permute.xlu0 %692
    %694 = vrot.lane.b32.xlu0 %v627, 64
    %v695 = vpop.permute.xlu0 %694
    %700 = vrot.lane.b32.xlu0 %v642, 64
    %v701 = vpop.permute.xlu0 %700
    %702 = vrot.lane.b32.xlu0 %v643, 64
    %v703 = vpop.permute.xlu0 %702
    %v706 = vsel %vm156, %v656, %v661
    %v707 = vsel %vm156, %v657, %v663
    %v708 = vsel %vm156, %v570, %v669
    %v709 = vsel %vm156, %v571, %v671
    %v710 = vsel %vm156, %v586, %v677
    %v711 = vsel %vm156, %v587, %v679
    %v712 = vsel %vm156, %v602, %v685
    %v713 = vsel %vm156, %v603, %v687
    %v714 = vsel %vm156, %v618, %v693
    %v715 = vsel %vm156, %v619, %v695
    %v716 = vsel %vm156, %v634, %v701
    %v717 = vsel %vm156, %v635, %v703
    %v718 = vld [vmem:[%s5] sm:$0xff]
    %v719 = vld [vmem:[%s5 + $0x8] sm:$0xff]
    %v720 = vld [vmem:[%s5 + $0x10] sm:$0xff]
    %v721 = vld [vmem:[%s5 + $0x18] sm:$0xff]
    %v722 = vld [vmem:[%s5 + $0x20] sm:$0xff]
    %v723 = vld [vmem:[%s5 + $0x28] sm:$0xff]
    %v724 = vld [vmem:[%s5 + $0x30] sm:$0xff]
    %v725 = vld [vmem:[%s5 + $0x38] sm:$0xff]
    %v726 = vld [vmem:[%s5 + $0x40] sm:$0xff]
    %v727 = vld [vmem:[%s5 + $0x48] sm:$0xff]
    %v728 = vld [vmem:[%s5 + $0x50] sm:$0xff]
    %v729 = vld [vmem:[%s5 + $0x58] sm:$0xff]
    %v730 = vld [vmem:[%s5 + $0x60] sm:$0xff]
    %v731 = vld [vmem:[%s5 + $0x68] sm:$0xff]
    %v732 = vld [vmem:[%s5 + $0x70] sm:$0xff]
    %v733 = vld [vmem:[%s5 + $0x78] sm:$0xff]
    %v734 = vld [vmem:[%s5 + $0x80] sm:$0xff]
    %v735 = vld [vmem:[%s5 + $0x88] sm:$0xff]
    %v736 = vld [vmem:[%s5 + $0x90] sm:$0xff]
    %v737 = vld [vmem:[%s5 + $0x98] sm:$0xff]
    %v738 = vld [vmem:[%s5 + $0xa0] sm:$0xff]
    %v739 = vld [vmem:[%s5 + $0xa8] sm:$0xff]
    %v740 = vld [vmem:[%s5 + $0xb0] sm:$0xff]
    %v741 = vld [vmem:[%s5 + $0xb8] sm:$0xff]
    %v742 = vld [vmem:[%s5 + $0xc0] sm:$0xff]
    %v743 = vld [vmem:[%s5 + $0xc8] sm:$0xff]
    %v744 = vld [vmem:[%s5 + $0xd0] sm:$0xff]
    %v745 = vld [vmem:[%s5 + $0xd8] sm:$0xff]
    %v746 = vld [vmem:[%s5 + $0xe0] sm:$0xff]
    %v747 = vld [vmem:[%s5 + $0xe8] sm:$0xff]
    %v748 = vld [vmem:[%s5 + $0xf0] sm:$0xff]
    %v749 = vld [vmem:[%s5 + $0xf8] sm:$0xff]
    %v750 = vld [vmem:[%s5 + $0x100] sm:$0xff]
    %v751 = vld [vmem:[%s5 + $0x108] sm:$0xff]
    %v752 = vld [vmem:[%s5 + $0x110] sm:$0xff]
    %v753 = vld [vmem:[%s5 + $0x118] sm:$0xff]
    %v754 = vld [vmem:[%s5 + $0x120] sm:$0xff]
    %v755 = vld [vmem:[%s5 + $0x128] sm:$0xff]
    %v756 = vld [vmem:[%s5 + $0x130] sm:$0xff]
    %v757 = vld [vmem:[%s5 + $0x138] sm:$0xff]
    %v758 = vld [vmem:[%s5 + $0x140] sm:$0xff]
    %v759 = vld [vmem:[%s5 + $0x148] sm:$0xff]
    %v760 = vld [vmem:[%s5 + $0x150] sm:$0xff]
    %v761 = vld [vmem:[%s5 + $0x158] sm:$0xff]
    %v762 = vld [vmem:[%s5 + $0x160] sm:$0xff]
    %v763 = vld [vmem:[%s5 + $0x168] sm:$0xff]
    %v764 = vld [vmem:[%s5 + $0x170] sm:$0xff]
    %v765 = vld [vmem:[%s5 + $0x178] sm:$0xff]
    %v766 = vld [vmem:[%s5 + $0x180] sm:$0xff]
    %v767 = vld [vmem:[%s5 + $0x188] sm:$0xff]
    %v768 = vld [vmem:[%s5 + $0x190] sm:$0xff]
    %v769 = vld [vmem:[%s5 + $0x198] sm:$0xff]
    %v770 = vld [vmem:[%s5 + $0x1a0] sm:$0xff]
    %v771 = vld [vmem:[%s5 + $0x1a8] sm:$0xff]
    %v772 = vld [vmem:[%s5 + $0x1b0] sm:$0xff]
    %v773 = vld [vmem:[%s5 + $0x1b8] sm:$0xff]
    %v774 = vld [vmem:[%s5 + $0x1c0] sm:$0xff]
    %v775 = vld [vmem:[%s5 + $0x1c8] sm:$0xff]
    %v776 = vld [vmem:[%s5 + $0x1d0] sm:$0xff]
    %v777 = vld [vmem:[%s5 + $0x1d8] sm:$0xff]
    %v778 = vld [vmem:[%s5 + $0x1e0] sm:$0xff]
    %v779 = vld [vmem:[%s5 + $0x1e8] sm:$0xff]
    %v780 = vld [vmem:[%s5 + $0x1f0] sm:$0xff]
    %v781 = vld [vmem:[%s5 + $0x1f8] sm:$0xff]
    %v782 = vld [vmem:[%s5 + $0x200] sm:$0xff]
    %v783 = vld [vmem:[%s5 + $0x208] sm:$0xff]
    %v784 = vld [vmem:[%s5 + $0x210] sm:$0xff]
    %v785 = vld [vmem:[%s5 + $0x218] sm:$0xff]
    %v786 = vld [vmem:[%s5 + $0x220] sm:$0xff]
    %v787 = vld [vmem:[%s5 + $0x228] sm:$0xff]
    %v788 = vld [vmem:[%s5 + $0x230] sm:$0xff]
    %v789 = vld [vmem:[%s5 + $0x238] sm:$0xff]
    %v790 = vld [vmem:[%s5 + $0x240] sm:$0xff]
    %v791 = vld [vmem:[%s5 + $0x248] sm:$0xff]
    %v792 = vld [vmem:[%s5 + $0x250] sm:$0xff]
    %v793 = vld [vmem:[%s5 + $0x258] sm:$0xff]
    %v794 = vld [vmem:[%s5 + $0x260] sm:$0xff]
    %v795 = vld [vmem:[%s5 + $0x268] sm:$0xff]
    %v796 = vld [vmem:[%s5 + $0x270] sm:$0xff]
    %v797 = vld [vmem:[%s5 + $0x278] sm:$0xff]
    %v798 = vld [vmem:[%s5 + $0x280] sm:$0xff]
    %v799 = vld [vmem:[%s5 + $0x288] sm:$0xff]
    %v800 = vld [vmem:[%s5 + $0x290] sm:$0xff]
    %v801 = vld [vmem:[%s5 + $0x298] sm:$0xff]
    %v802 = vld [vmem:[%s5 + $0x2a0] sm:$0xff]
    %v803 = vld [vmem:[%s5 + $0x2a8] sm:$0xff]
    %v804 = vld [vmem:[%s5 + $0x2b0] sm:$0xff]
    %v805 = vld [vmem:[%s5 + $0x2b8] sm:$0xff]
    %v806 = vld [vmem:[%s5 + $0x2c0] sm:$0xff]
    %v807 = vld [vmem:[%s5 + $0x2c8] sm:$0xff]
    %v808 = vld [vmem:[%s5 + $0x2d0] sm:$0xff]
    %v809 = vld [vmem:[%s5 + $0x2d8] sm:$0xff]
    %v810 = vld [vmem:[%s5 + $0x2e0] sm:$0xff]
    %v811 = vld [vmem:[%s5 + $0x2e8] sm:$0xff]
    %v812 = vld [vmem:[%s5 + $0x2f0] sm:$0xff]
    %v813 = vld [vmem:[%s5 + $0x2f8] sm:$0xff]
    %814 = vmatprep.subr.mxu0 0.0
    %815 = vmatpush1.msra.mxu0 %v718
    %816 = vmatprep.subr.mxu0 0.0
    %817 = vmatpush1.msra.mxu0 %v719
    %818 = vmatprep.subr.mxu0 0.0
    %819 = vmatpush1.msra.mxu0 %v720
    %820 = vmatprep.subr.mxu0 0.0
    %821 = vmatpush1.msra.mxu0 %v721
    %822 = vmatprep.subr.mxu0 0.0
    %823 = vmatpush1.msra.mxu0 %v722
    %824 = vmatprep.subr.mxu0 0.0
    %825 = vmatpush1.msra.mxu0 %v723
    %826 = vmatprep.subr.mxu0 0.0
    %827 = vmatpush1.msra.mxu0 %v724
    %828 = vmatprep.subr.mxu0 0.0
    %829 = vmatpush1.msra.mxu0 %v725
    %830 = vmatprep.subr.mxu0 0.0
    %831 = vmatpush1.msra.mxu0 %v726
    %832 = vmatprep.subr.mxu0 0.0
    %833 = vmatpush1.msra.mxu0 %v727
    %834 = vmatprep.subr.mxu0 0.0
    %835 = vmatpush1.msra.mxu0 %v728
    %836 = vmatprep.subr.mxu0 0.0
    %837 = vmatpush1.msra.mxu0 %v729
    %838 = vmatprep.subr.mxu0 0.0
    %839 = vmatpush1.msra.mxu0 %v730
    %840 = vmatprep.subr.mxu0 0.0
    %841 = vmatpush1.msra.mxu0 %v731
    %842 = vmatprep.subr.mxu0 0.0
    %843 = vmatpush1.msra.mxu0 %v732
    %844 = vmatprep.subr.mxu0 0.0
    %845 = vmatpush1.msra.mxu0 %v733
    %846 = vmatprep.subr.mxu0 0.0
    %847 = vmatpush1.msra.mxu0 %v734
    %848 = vmatprep.subr.mxu0 0.0
    %849 = vmatpush1.msra.mxu0 %v735
    %850 = vmatprep.subr.mxu0 0.0
    %851 = vmatpush1.msra.mxu0 %v736
    %852 = vmatprep.subr.mxu0 0.0
    %853 = vmatpush1.msra.mxu0 %v737
    %854 = vmatprep.subr.mxu0 0.0
    %855 = vmatpush1.msra.mxu0 %v738
    %856 = vmatprep.subr.mxu0 0.0
    %857 = vmatpush1.msra.mxu0 %v739
    %858 = vmatprep.subr.mxu0 0.0
    %859 = vmatpush1.msra.mxu0 %v740
    %860 = vmatprep.subr.mxu0 0.0
    %861 = vmatpush1.msra.mxu0 %v741
    %862 = vmatprep.subr.mxu0 0.0
    %863 = vmatpush1.msra.mxu0 %v742
    %864 = vmatprep.subr.mxu0 0.0
    %865 = vmatpush1.msra.mxu0 %v743
    %866 = vmatprep.subr.mxu0 0.0
    %867 = vmatpush1.msra.mxu0 %v744
    %868 = vmatprep.subr.mxu0 0.0
    %869 = vmatpush1.msra.mxu0 %v745
    %870 = vmatprep.subr.mxu0 0.0
    %871 = vmatpush1.msra.mxu0 %v746
    %872 = vmatprep.subr.mxu0 0.0
    %873 = vmatpush1.msra.mxu0 %v747
    %874 = vmatprep.subr.mxu0 0.0
    %875 = vmatpush1.msra.mxu0 %v748
    %876 = vmatprep.subr.mxu0 0.0
    %877 = vmatpush1.msra.mxu0 %v749
    %878 = vmatprep.mubr.f32.mxu0 %v708
    %879 = vmatmul.mubr.f32.gmra.mrb[0].mxu0 %v706
    %v880 = vpop.f32.mrb[0].mxu0
    %v881 = vadd.f32 0.0, %v880
    %v882 = vpop.f32.mrb[0].mxu0
    %883 = vmatprep.mubr.f32.mxu0 %v709
    %884 = vmatmul.mubr.f32.gmra.mrb[0].mxu0 %v707
    %v885 = vpop.f32.mrb[0].mxu0
    %v886 = vadd.f32 0.0, %v885
    %v887 = vpop.f32.mrb[0].mxu0
    %888 = vdwg.mxu0
    %889 = vmatprep.subr.mxu0 0.0
    %890 = vmatpush1.msra.mxu0 %v750
    %891 = vmatprep.subr.mxu0 0.0
    %892 = vmatpush1.msra.mxu0 %v751
    %893 = vmatprep.subr.mxu0 0.0
    %894 = vmatpush1.msra.mxu0 %v752
    %895 = vmatprep.subr.mxu0 0.0
    %896 = vmatpush1.msra.mxu0 %v753
    %897 = vmatprep.subr.mxu0 0.0
    %898 = vmatpush1.msra.mxu0 %v754
    %899 = vmatprep.subr.mxu0 0.0
    %900 = vmatpush1.msra.mxu0 %v755
    %901 = vmatprep.subr.mxu0 0.0
    %902 = vmatpush1.msra.mxu0 %v756
    %903 = vmatprep.subr.mxu0 0.0
    %904 = vmatpush1.msra.mxu0 %v757
    %905 = vmatprep.subr.mxu0 0.0
    %906 = vmatpush1.msra.mxu0 %v758
    %907 = vmatprep.subr.mxu0 0.0
    %908 = vmatpush1.msra.mxu0 %v759
    %909 = vmatprep.subr.mxu0 0.0
    %910 = vmatpush1.msra.mxu0 %v760
    %911 = vmatprep.subr.mxu0 0.0
    %912 = vmatpush1.msra.mxu0 %v761
    %913 = vmatprep.subr.mxu0 0.0
    %914 = vmatpush1.msra.mxu0 %v762
    %915 = vmatprep.subr.mxu0 0.0
    %916 = vmatpush1.msra.mxu0 %v763
    %917 = vmatprep.subr.mxu0 0.0
    %918 = vmatpush1.msra.mxu0 %v764
    %919 = vmatprep.subr.mxu0 0.0
    %920 = vmatpush1.msra.mxu0 %v765
    %921 = vmatprep.subr.mxu0 0.0
    %922 = vmatpush1.msra.mxu0 %v766
    %923 = vmatprep.subr.mxu0 0.0
    %924 = vmatpush1.msra.mxu0 %v767
    %925 = vmatprep.subr.mxu0 0.0
    %926 = vmatpush1.msra.mxu0 %v768
    %927 = vmatprep.subr.mxu0 0.0
    %928 = vmatpush1.msra.mxu0 %v769
    %929 = vmatprep.subr.mxu0 0.0
    %930 = vmatpush1.msra.mxu0 %v770
    %931 = vmatprep.subr.mxu0 0.0
    %932 = vmatpush1.msra.mxu0 %v771
    %933 = vmatprep.subr.mxu0 0.0
    %934 = vmatpush1.msra.mxu0 %v772
    %935 = vmatprep.subr.mxu0 0.0
    %936 = vmatpush1.msra.mxu0 %v773
    %937 = vmatprep.subr.mxu0 0.0
    %938 = vmatpush1.msra.mxu0 %v774
    %939 = vmatprep.subr.mxu0 0.0
    %940 = vmatpush1.msra.mxu0 %v775
    %941 = vmatprep.subr.mxu0 0.0
    %942 = vmatpush1.msra.mxu0 %v776
    %943 = vmatprep.subr.mxu0 0.0
    %944 = vmatpush1.msra.mxu0 %v777
    %945 = vmatprep.subr.mxu0 0.0
    %946 = vmatpush1.msra.mxu0 %v778
    %947 = vmatprep.subr.mxu0 0.0
    %948 = vmatpush1.msra.mxu0 %v779
    %949 = vmatprep.subr.mxu0 0.0
    %950 = vmatpush1.msra.mxu0 %v780
    %951 = vmatprep.subr.mxu0 0.0
    %952 = vmatpush1.msra.mxu0 %v781
    %953 = vmatprep.mubr.f32.mxu0 %v712
    %954 = vmatmul.mubr.f32.gmra.mrb[0].mxu0 %v710
    %v955 = vpop.f32.mrb[0].mxu0
    %v956 = vadd.f32 %v881, %v955
    %v957 = vpop.f32.mrb[0].mxu0
    %958 = vmatprep.mubr.f32.mxu0 %v713
    %959 = vmatmul.mubr.f32.gmra.mrb[0].mxu0 %v711
    %v960 = vpop.f32.mrb[0].mxu0
    %v961 = vadd.f32 %v886, %v960
    %v962 = vpop.f32.mrb[0].mxu0
    %963 = vdwg.mxu0
    %964 = vmatprep.subr.mxu0 0.0
    %965 = vmatpush1.msra.mxu0 %v782
    %966 = vmatprep.subr.mxu0 0.0
    %967 = vmatpush1.msra.mxu0 %v783
    %968 = vmatprep.subr.mxu0 0.0
    %969 = vmatpush1.msra.mxu0 %v784
    %970 = vmatprep.subr.mxu0 0.0
    %971 = vmatpush1.msra.mxu0 %v785
    %972 = vmatprep.subr.mxu0 0.0
    %973 = vmatpush1.msra.mxu0 %v786
    %974 = vmatprep.subr.mxu0 0.0
    %975 = vmatpush1.msra.mxu0 %v787
    %976 = vmatprep.subr.mxu0 0.0
    %977 = vmatpush1.msra.mxu0 %v788
    %978 = vmatprep.subr.mxu0 0.0
    %979 = vmatpush1.msra.mxu0 %v789
    %980 = vmatprep.subr.mxu0 0.0
    %981 = vmatpush1.msra.mxu0 %v790
    %982 = vmatprep.subr.mxu0 0.0
    %983 = vmatpush1.msra.mxu0 %v791
    %984 = vmatprep.subr.mxu0 0.0
    %985 = vmatpush1.msra.mxu0 %v792
    %986 = vmatprep.subr.mxu0 0.0
    %987 = vmatpush1.msra.mxu0 %v793
    %988 = vmatprep.subr.mxu0 0.0
    %989 = vmatpush1.msra.mxu0 %v794
    %990 = vmatprep.subr.mxu0 0.0
    %991 = vmatpush1.msra.mxu0 %v795
    %992 = vmatprep.subr.mxu0 0.0
    %993 = vmatpush1.msra.mxu0 %v796
    %994 = vmatprep.subr.mxu0 0.0
    %995 = vmatpush1.msra.mxu0 %v797
    %996 = vmatprep.subr.mxu0 0.0
    %997 = vmatpush1.msra.mxu0 %v798
    %998 = vmatprep.subr.mxu0 0.0
    %999 = vmatpush1.msra.mxu0 %v799
    %1000 = vmatprep.subr.mxu0 0.0
    %1001 = vmatpush1.msra.mxu0 %v800
    %1002 = vmatprep.subr.mxu0 0.0
    %1003 = vmatpush1.msra.mxu0 %v801
    %1004 = vmatprep.subr.mxu0 0.0
    %1005 = vmatpush1.msra.mxu0 %v802
    %1006 = vmatprep.subr.mxu0 0.0
    %1007 = vmatpush1.msra.mxu0 %v803
    %1008 = vmatprep.subr.mxu0 0.0
    %1009 = vmatpush1.msra.mxu0 %v804
    %1010 = vmatprep.subr.mxu0 0.0
    %1011 = vmatpush1.msra.mxu0 %v805
    %1012 = vmatprep.subr.mxu0 0.0
    %1013 = vmatpush1.msra.mxu0 %v806
    %1014 = vmatprep.subr.mxu0 0.0
    %1015 = vmatpush1.msra.mxu0 %v807
    %1016 = vmatprep.subr.mxu0 0.0
    %1017 = vmatpush1.msra.mxu0 %v808
    %1018 = vmatprep.subr.mxu0 0.0
    %1019 = vmatpush1.msra.mxu0 %v809
    %1020 = vmatprep.subr.mxu0 0.0
    %1021 = vmatpush1.msra.mxu0 %v810
    %1022 = vmatprep.subr.mxu0 0.0
    %1023 = vmatpush1.msra.mxu0 %v811
    %1024 = vmatprep.subr.mxu0 0.0
    %1025 = vmatpush1.msra.mxu0 %v812
    %1026 = vmatprep.subr.mxu0 0.0
    %1027 = vmatpush1.msra.mxu0 %v813
    %1028 = vmatprep.mubr.f32.mxu0 %v716
    %1029 = vmatmul.mubr.f32.gmra.mrb[0].mxu0 %v714
    %v1030 = vpop.f32.mrb[0].mxu0
    %v1031 = vadd.f32 %v956, %v1030
    %v1032 = vpop.f32.mrb[0].mxu0
    %1033 = vmatprep.mubr.f32.mxu0 %v717
    %1034 = vmatmul.mubr.f32.gmra.mrb[0].mxu0 %v715
    %v1035 = vpop.f32.mrb[0].mxu0
    %v1036 = vadd.f32 %v961, %v1035
    %v1037 = vpop.f32.mrb[0].mxu0
    %1038 = vdwg.mxu0
    %v1039 = vld [vmem:[%s6] sm:$0xff]
    %v1040 = vld [vmem:[%s6 + $0x8] sm:$0xff]
    %v1041 = vld [vmem:[%s6 + $0x10] sm:$0xff]
    %v1042 = vld [vmem:[%s6 + $0x18] sm:$0xff]
    %v1043 = vld [vmem:[%s6 + $0x20] sm:$0xff]
    %v1044 = vld [vmem:[%s6 + $0x28] sm:$0xff]
    %v1045 = vld [vmem:[%s6 + $0x30] sm:$0xff]
    %v1046 = vld [vmem:[%s6 + $0x38] sm:$0xff]
    %v1047 = vld [vmem:[%s7] sm:$0x1]
    %v1049 = vlaneseq
    %v1050 = vshrl.u32 %v1049, 7
    %v1051 = vsub.s32 0, %v1050
    %v1052 = vrot.slane %v1047, %v1051
    %v1055 = vsel %vm156, %v1031, 0
    %v1058 = vsel %vm156, %v1036, 0
    %1060 = vmatprep.subr.mxu0 0.0
    %1061 = vmatpush1.msra.mxu0 %v1039
    %1062 = vmatprep.subr.mxu0 0.0
    %1063 = vmatpush1.msra.mxu0 %v1040
    %1064 = vmatprep.subr.mxu0 0.0
    %1065 = vmatpush1.msra.mxu0 %v1041
    %1066 = vmatprep.subr.mxu0 0.0
    %1067 = vmatpush1.msra.mxu0 %v1042
    %1068 = vmatprep.subr.mxu0 0.0
    %1069 = vmatpush1.msra.mxu0 %v1043
    %1070 = vmatprep.subr.mxu0 0.0
    %1071 = vmatpush1.msra.mxu0 %v1044
    %1072 = vmatprep.subr.mxu0 0.0
    %1073 = vmatpush1.msra.mxu0 %v1045
    %1074 = vmatprep.subr.mxu0 0.0
    %1075 = vmatpush1.msra.mxu0 %v1046
    %1076 = vmatprep.subr.mxu0 0.0
    %1077 = vmatpush1.msra.mxu0 0.0
    %1078 = vmatprep.subr.mxu0 0.0
    %1079 = vmatpush1.msra.mxu0 0.0
    %1080 = vmatprep.subr.mxu0 0.0
    %1081 = vmatpush1.msra.mxu0 0.0
    %1082 = vmatprep.subr.mxu0 0.0
    %1083 = vmatpush1.msra.mxu0 0.0
    %1084 = vmatprep.subr.mxu0 0.0
    %1085 = vmatpush1.msra.mxu0 0.0
    %1086 = vmatprep.subr.mxu0 0.0
    %1087 = vmatpush1.msra.mxu0 0.0
    %1088 = vmatprep.subr.mxu0 0.0
    %1089 = vmatpush1.msra.mxu0 0.0
    %1090 = vmatprep.subr.mxu0 0.0
    %1091 = vmatpush1.msra.mxu0 0.0
    %1092 = vmatprep.subr.mxu0 0.0
    %1093 = vmatpush1.msra.mxu0 0.0
    %1094 = vmatprep.subr.mxu0 0.0
    %1095 = vmatpush1.msra.mxu0 0.0
    %1096 = vmatprep.subr.mxu0 0.0
    %1097 = vmatpush1.msra.mxu0 0.0
    %1098 = vmatprep.subr.mxu0 0.0
    %1099 = vmatpush1.msra.mxu0 0.0
    %1100 = vmatprep.subr.mxu0 0.0
    %1101 = vmatpush1.msra.mxu0 0.0
    %1102 = vmatprep.subr.mxu0 0.0
    %1103 = vmatpush1.msra.mxu0 0.0
    %1104 = vmatprep.subr.mxu0 0.0
    %1105 = vmatpush1.msra.mxu0 0.0
    %1106 = vmatprep.subr.mxu0 0.0
    %1107 = vmatpush1.msra.mxu0 0.0
    %1108 = vmatprep.subr.mxu0 0.0
    %1109 = vmatpush1.msra.mxu0 0.0
    %1110 = vmatprep.subr.mxu0 0.0
    %1111 = vmatpush1.msra.mxu0 0.0
    %1112 = vmatprep.subr.mxu0 0.0
    %1113 = vmatpush1.msra.mxu0 0.0
    %1114 = vmatprep.subr.mxu0 0.0
    %1115 = vmatpush1.msra.mxu0 0.0
    %1116 = vmatprep.subr.mxu0 0.0
    %1117 = vmatpush1.msra.mxu0 0.0
    %1118 = vmatprep.subr.mxu0 0.0
    %1119 = vmatpush1.msra.mxu0 0.0
    %1120 = vmatprep.subr.mxu0 0.0
    %1121 = vmatpush1.msra.mxu0 0.0
    %1122 = vmatprep.subr.mxu0 0.0
    %1123 = vmatpush1.msra.mxu0 0.0
    %1124 = vmatprep.mubr.f32.mxu0 0.0
    %1125 = vmatmul.mubr.f32.gmra.mrb[0].mxu0 %v1055
    %v1126 = vpop.f32.mrb[0].mxu0
    %v1127 = vadd.f32 %v1052, %v1126
    %v1128 = vpop.f32.mrb[0].mxu0
    %1129 = vmatprep.mubr.f32.mxu0 0.0
    %1130 = vmatmul.mubr.f32.gmra.mrb[0].mxu0 %v1058
    %v1131 = vpop.f32.mrb[0].mxu0
    %v1132 = vadd.f32 %v1052, %v1131
    %v1133 = vpop.f32.mrb[0].mxu0
    %1134 = vdwg.mxu0
    %v1135 = vadd.f32 %v1127, %v123
    %v1136 = vadd.f32 %v1132, %v128
    %v1137 = vsel %vm156, %v1135, 0.0
    %1138 = vadd.xlane.f32.xlu0 %v1137
    %v1139 = vpop.xlane.xlu0 %1138
    %v1140 = vsel %vm156, %v1136, 0.0
    %1141 = vadd.xlane.f32.xlu0 %v1140
    %v1142 = vpop.xlane.xlu0 %1141
    %v1143 = vrcp.pop 64.0
    %v1144 = vmul.f32 %v1139, %v1143
    %v1145 = vmul.f32 %v1142, %v1143
    %v1146 = vsub.f32 %v1135, %v1144
    %v1147 = vsub.f32 %v1136, %v1145
    %v1148 = vmul.f32 %v1146, %v1146
    %v1149 = vmul.f32 %v1147, %v1147
    %v1150 = vsel %vm156, %v1148, 0.0
    %1151 = vadd.xlane.f32.xlu0 %v1150
    %v1152 = vpop.xlane.xlu0 %1151
    %v1153 = vsel %vm156, %v1149, 0.0
    %1154 = vadd.xlane.f32.xlu0 %v1153
    %v1155 = vpop.xlane.xlu0 %1154
    %v1156 = vmul.f32 %v1152, %v1143
    %v1157 = vmul.f32 %v1155, %v1143
    %v1158 = vadd.f32 %v1156, 1e-05
    %v1159 = vadd.f32 %v1157, 1e-05
    %v1160 = vrsqrt.pop %v1158
    %v1161 = vrsqrt.pop %v1159
    %v1162 = vmul.f32 %v1146, %v1160
    %v1163 = vmul.f32 %v1147, %v1161
    %v1164 = vld [vmem:[%s8] sm:$0x1]
    %v1166 = vlaneseq
    %v1167 = vshrl.u32 %v1166, 7
    %v1168 = vsub.s32 0, %v1167
    %v1169 = vrot.slane %v1164, %v1168
    %v1171 = vmul.f32 %v1162, %v1169
    %v1172 = vmul.f32 %v1163, %v1169
    %v1173 = vld [vmem:[%s9] sm:$0x1]
    %v1175 = vlaneseq
    %v1176 = vshrl.u32 %v1175, 7
    %v1177 = vsub.s32 0, %v1176
    %v1178 = vrot.slane %v1173, %v1177
    %v1180 = vadd.f32 %v1171, %v1178
    %v1181 = vadd.f32 %v1172, %v1178
    %1182 = vst.msk [vmem:[#allocation2] sm:$0xff] %vm156, %v1180
    %1183 = vst.msk [vmem:[#allocation2 + $0x8] sm:$0xff] %vm156, %v1181
    // Predicated region
    $region42: #{projection_head.1} parent=1 // pred_check
      _
    $region43: #{projection_head.1} parent=1 // pred_check_branch
      %1185 = sbr.rel (0) target = $region45
    $region44: #{projection_head.1} parent=1 // pred_region
      %s1187 = ssub.s32 256, 256
      %1188 = vsyncadd [#allocation3], %s1187
      %s1189 = sshll.u32 [#allocation2], 4
      %s1190 = int_to_ptr.vmem [resolvable:$true] %s1189
      %1195 = dma.vmem_to_hbm [thread:$0]  %s1190, 256, %s10, [#allocation3], 128, 128, 8
    $region45: #{projection_head.1} parent=1 // pred_fallthru
      _
    // Predicated region
    $region46: #{projection_head.1} parent=1 // pred_check
      _
    $region47: #{projection_head.1} parent=1 // pred_check_branch
      %1197 = sbr.rel (0) target = $region49
    $region48: #{projection_head.1} parent=1 // pred_region
      %1198 = dma.done [#allocation3], 256
    $region49: #{projection_head.1} parent=1 // pred_fallthru
      _
    %1199 = vsyncpa [#allocation3], 1

</llo_original>
